<compile_context>
chip_gen: v7x
topology: tpu7x:2x2x1
jax: 0.10.0
libtpu: 0.0.40
codegen_flags: <defaults>
</compile_context>

<pallas_src>
import math

import jax
import jax.numpy as jnp
from jax.experimental import pallas as pl
from jax.experimental.pallas import tpu as pltpu

HIDDEN1_UNITS = 300
HIDDEN2_UNITS = 600
LOG_STD_MAX = -5.0   # values exactly as defined in the original module
LOG_STD_MIN = 2.0
STATE_SIZE = 29
ACTION_SIZE = 3
HEAD_OUT = 2 * ACTION_SIZE       # fused [mean | log_std]

# Lane/sublane-padded sizes used inside the kernel (zero padding, exact math).
H1_PAD = 384                      # 300 -> 384 (3 * 128)
H2_PAD = 640                      # 600 -> 640 (5 * 128)
HEAD_PAD = 128                    # 6   -> 128 (one full lane group)

MAX_TM = 1024                     # max batch tile; ~10 MB VMEM/tile, v7x-safe


# ----------------------------------------------------------------------------
# Kernel
# ----------------------------------------------------------------------------
def _policy_kernel(x_ref, w1_ref, b1_ref, w2_ref, b2_ref, wh_ref, bh_ref,
                   out_ref):
    # x tile: (TM, 29) f32. Cast matmul operands to bf16, accumulate in f32.
    x = x_ref[...].astype(jnp.bfloat16)

    h1 = jnp.dot(x, w1_ref[...], preferred_element_type=jnp.float32) + b1_ref[...]
    h1 = jnp.maximum(h1, 0.0)                       # f32 elementwise (v5e-safe)

    h2 = jnp.dot(h1.astype(jnp.bfloat16), w2_ref[...],
                 preferred_element_type=jnp.float32) + b2_ref[...]
    h2 = jnp.maximum(h2, 0.0)

    # Fused heads, 128-lane padded: [mean | log_std | zeros]; the log_std
    # affine is pre-folded into wh/bh at pack time.
    out = jnp.dot(h2.astype(jnp.bfloat16), wh_ref[...],
                  preferred_element_type=jnp.float32) + bh_ref[...]
    out_ref[...] = out.astype(out_ref.dtype)        # full-lane unmasked store


# ----------------------------------------------------------------------------
# Wrapper
# ----------------------------------------------------------------------------
def _choose_tiling(batch):
    """Balanced tiling: fewest tiles of size <= MAX_TM, each rounded to 8 rows.

    Batches > MAX_TM automatically yield >= 2 balanced tiles, which lets the
    'parallel' grid axis shard across both v7x TensorCores.
    """
    num_tiles = max(1, -(-batch // MAX_TM))
    tm = -(-batch // num_tiles)
    tm = max(8, ((tm + 7) // 8) * 8)
    return tm, num_tiles


def policy_forward(x, packed_params):
    """Full Policy.forward in one pallas_call with a parallel batch grid."""
    w1, b1, w2, b2, wh, bh = packed_params
    batch = x.shape[0]

    tm, num_tiles = _choose_tiling(batch)
    padded = tm * num_tiles
    if padded != batch:
        x = jnp.pad(x, ((0, padded - batch), (0, 0)))

    def whole(arr):
        # Whole-array block, same tile for every grid point -> stays VMEM-resident.
        return pl.BlockSpec(arr.shape, lambda i, _nd=arr.ndim: (0,) * _nd)

    out = pl.pallas_call(
        _policy_kernel,
        out_shape=jax.ShapeDtypeStruct((padded, HEAD_PAD), jnp.float32),
        grid_spec=pl.GridSpec(
            grid=(num_tiles,),
            in_specs=[
                pl.BlockSpec((tm, STATE_SIZE), lambda i: (i, 0)),   # x tile
                whole(w1), whole(b1),
                whole(w2), whole(b2),
                whole(wh), whole(bh),
            ],
            out_specs=pl.BlockSpec((tm, HEAD_PAD), lambda i: (i, 0)),
        ),
        compiler_params=pltpu.CompilerParams(
            dimension_semantics=("parallel",)),
    )(x, w1, b1, w2, b2, wh, bh)

    out = out[:batch]
    return out[:, :ACTION_SIZE], out[:, ACTION_SIZE:HEAD_OUT]


# ----------------------------------------------------------------------------
# Parameter init / packing
# ----------------------------------------------------------------------------
def xavier_uniform(key, fan_in, fan_out, gain=1.0, dtype=jnp.float32):
    # Matches torch.nn.init.xavier_uniform_ for a (fan_out, fan_in) weight,
    # stored directly as (in, out) for the kernel layout.
    limit = gain * math.sqrt(6.0 / (fan_in + fan_out))
    return jax.random.uniform(key, (fan_in, fan_out), dtype=dtype,
                              minval=-limit, maxval=limit)


def init_policy_params(key):
    k1, k2, k3, k4 = jax.random.split(key, 4)
    w1 = xavier_uniform(k1, STATE_SIZE, HIDDEN1_UNITS)
    b1 = jnp.zeros((1, HIDDEN1_UNITS), jnp.float32)
    w2 = xavier_uniform(k2, HIDDEN1_UNITS, HIDDEN2_UNITS)
    b2 = jnp.zeros((1, HIDDEN2_UNITS), jnp.float32)
    wm = xavier_uniform(k3, HIDDEN2_UNITS, ACTION_SIZE)
    bm = jnp.zeros((1, ACTION_SIZE), jnp.float32)
    wl = xavier_uniform(k4, HIDDEN2_UNITS, ACTION_SIZE)
    bl = jnp.zeros((1, ACTION_SIZE), jnp.float32)
    return (w1, b1, w2, b2, wm, bm, wl, bl)


def _pad2d(a, rows, cols):
    return jnp.pad(a, ((0, rows - a.shape[0]), (0, cols - a.shape[1])))


def pack_policy_params(params):
    """One-time transform: bf16 matmul weights, fused + lane-padded heads,
    zero-padded hidden dims, folded log_std affine.  Zero padding preserves
    the exact math (relu(0)=0, zero weight rows/cols contribute nothing)."""
    w1, b1, w2, b2, wm, bm, wl, bl = params
    alpha = 0.5 * (LOG_STD_MAX - LOG_STD_MIN)

    # Fused head: [mean | alpha*log_std | zeros] -> (H2_PAD, HEAD_PAD)
    wh = jnp.concatenate([wm, alpha * wl], axis=1)
    wh = _pad2d(wh, H2_PAD, HEAD_PAD).astype(jnp.bfloat16)
    bh = jnp.concatenate([bm, LOG_STD_MIN + alpha * (bl + 1.0)], axis=1)
    bh = _pad2d(bh, 1, HEAD_PAD).astype(jnp.float32)

    w1p = _pad2d(w1, STATE_SIZE, H1_PAD).astype(jnp.bfloat16)
    b1p = _pad2d(b1, 1, H1_PAD).astype(jnp.float32)
    w2p = _pad2d(w2, H1_PAD, H2_PAD).astype(jnp.bfloat16)
    b2p = _pad2d(b2, 1, H2_PAD).astype(jnp.float32)
    return (w1p, b1p, w2p, b2p, wh, bh)


# ----------------------------------------------------------------------------
# References
# ----------------------------------------------------------------------------
def policy_forward_ref(x, params):
    """Pure-JAX f32 reference with the original (un-fused, un-quantized) math."""
    w1, b1, w2, b2, wm, bm, wl, bl = params
    h1 = jnp.maximum(x @ w1 + b1, 0.0)
    h2 = jnp.maximum(h1 @ w2 + b2, 0.0)
    mean = h2 @ wm + bm
    log_std = h2 @ wl + bl
    log_std = LOG_STD_MIN + 0.5 * (LOG_STD_MAX - LOG_STD_MIN) * (log_std + 1.0)
    return mean, log_std


def policy_forward_packed_ref(x, packed_params):
    """Pure-JAX reference using the exact packed/padded bf16 weights (oracle)."""
    w1, b1, w2, b2, wh, bh = packed_params
    h1 = jnp.maximum(jnp.dot(x.astype(jnp.bfloat16), w1,
                             preferred_element_type=jnp.float32) + b1, 0.0)
    h2 = jnp.maximum(jnp.dot(h1.astype(jnp.bfloat16), w2,
                             preferred_element_type=jnp.float32) + b2, 0.0)
    out = jnp.dot(h2.astype(jnp.bfloat16), wh,
                  preferred_element_type=jnp.float32) + bh
    return out[:, :ACTION_SIZE], out[:, ACTION_SIZE:HEAD_OUT]


# TODO(synk): get_action (Normal rsample + tanh squashing + log_prob) involves
# host-side RNG/distribution plumbing and is left outside the kernel.

if __name__ == "__main__":
    key = jax.random.PRNGKey(0)
    k_param, k_x, k_x2, k_x3 = jax.random.split(key, 4)

    params = init_policy_params(k_param)
    packed = pack_policy_params(params)

    # --- small batch (pads 4 -> 8 rows, single grid point) ---
    batch = 4
    x = jax.random.normal(k_x, (batch, STATE_SIZE), dtype=jnp.float32)
    mean, log_std = policy_forward(x, packed)
    jax.block_until_ready((mean, log_std))

    assert mean.shape == (batch, ACTION_SIZE)
    assert log_std.shape == (batch, ACTION_SIZE)

    # Tight check vs. a reference using the same packed bf16 weights.
    mean_p, log_std_p = policy_forward_packed_ref(x, packed)
    assert jnp.allclose(mean, mean_p, atol=1e-4, rtol=1e-4)
    assert jnp.allclose(log_std, log_std_p, atol=1e-4, rtol=1e-4)

    # Loose check vs. the original f32 math (bf16 quantization error only).
    mean_f, log_std_f = policy_forward_ref(x, params)
    assert jnp.allclose(mean, mean_f, atol=1e-1, rtol=1e-1)
    assert jnp.allclose(log_std, log_std_f, atol=1e-1, rtol=1e-1)

    # --- batch 600: balanced single tile (600 -> 608, only 8 padding rows) ---
    batch2 = 600
    x2 = jax.random.normal(k_x2, (batch2, STATE_SIZE), dtype=jnp.float32)
    mean2, log_std2 = policy_forward(x2, packed)
    jax.block_until_ready((mean2, log_std2))
    mean2_p, log_std2_p = policy_forward_packed_ref(x2, packed)
    assert mean2.shape == (batch2, ACTION_SIZE)
    assert jnp.allclose(mean2, mean2_p, atol=1e-4, rtol=1e-4)
    assert jnp.allclose(log_std2, log_std2_p, atol=1e-4, rtol=1e-4)

    # --- batch 1100: exercises the multi-tile (2-step, v7x-shardable) grid ---
    batch3 = 1100
    x3 = jax.random.normal(k_x3, (batch3, STATE_SIZE), dtype=jnp.float32)
    mean3, log_std3 = policy_forward(x3, packed)
    jax.block_until_ready((mean3, log_std3))
    mean3_p, log_std3_p = policy_forward_packed_ref(x3, packed)
    assert mean3.shape == (batch3, ACTION_SIZE)
    assert jnp.allclose(mean3, mean3_p, atol=1e-4, rtol=1e-4)
    assert jnp.allclose(log_std3, log_std3_p, atol=1e-4, rtol=1e-4)

    print("KERNEL_OK")
</pallas_src>

<mosaic_0001>
module attributes {stable_mosaic.version = 11 : i64} {
  func.func @_policy_kernel(%arg0: i32, %arg1: memref<8x29xf32, #tpu.memory_space<vmem>>, %arg2: memref<29x384xbf16, #tpu.memory_space<vmem>>, %arg3: memref<1x384xf32, #tpu.memory_space<vmem>>, %arg4: memref<384x640xbf16, #tpu.memory_space<vmem>>, %arg5: memref<1x640xf32, #tpu.memory_space<vmem>>, %arg6: memref<640x128xbf16, #tpu.memory_space<vmem>>, %arg7: memref<1x128xf32, #tpu.memory_space<vmem>>, %arg8: memref<8x128xf32, #tpu.memory_space<vmem>>) attributes {dimension_semantics = [#tpu.dimension_semantics<parallel>], iteration_bounds = array<i64: 1>, scalar_prefetch = 0 : i64, scratch_operands = 0 : i64, tpu.core_type = #tpu.core_type<tc>, window_params = [{transform_indices = @transform_0, window_bounds = array<i64: 8, 29>}, {pipeline_mode = #tpu.pipeline_mode<synchronous>, transform_indices = @transform_1, window_bounds = array<i64: 29, 384>}, {pipeline_mode = #tpu.pipeline_mode<synchronous>, transform_indices = @transform_2, window_bounds = array<i64: 1, 384>}, {pipeline_mode = #tpu.pipeline_mode<synchronous>, transform_indices = @transform_3, window_bounds = array<i64: 384, 640>}, {pipeline_mode = #tpu.pipeline_mode<synchronous>, transform_indices = @transform_4, window_bounds = array<i64: 1, 640>}, {pipeline_mode = #tpu.pipeline_mode<synchronous>, transform_indices = @transform_5, window_bounds = array<i64: 640, 128>}, {pipeline_mode = #tpu.pipeline_mode<synchronous>, transform_indices = @transform_6, window_bounds = array<i64: 1, 128>}, {transform_indices = @transform_7, window_bounds = array<i64: 8, 128>}]} {
    %c0 = arith.constant 0 : index
    %c0_0 = arith.constant 0 : index
    %0 = vector.load %arg1[%c0, %c0_0] : memref<8x29xf32, #tpu.memory_space<vmem>>, vector<8x29xf32>
    %1 = arith.truncf %0 : vector<8x29xf32> to vector<8x29xbf16>
    %c0_1 = arith.constant 0 : index
    %c0_2 = arith.constant 0 : index
    %2 = vector.load %arg2[%c0_1, %c0_2] : memref<29x384xbf16, #tpu.memory_space<vmem>>, vector<29x384xbf16>
    %cst = arith.constant dense<0.000000e+00> : vector<8x384xf32>
    %3 = tpu.matmul %1, %2, %cst {dimension_numbers = #tpu.dot_dimension_numbers<[1], [0], [0], [1], [0, 0, 1, 1], [], []>} : vector<8x29xbf16>, vector<29x384xbf16>, vector<8x384xf32> -> vector<8x384xf32>
    %c0_3 = arith.constant 0 : index
    %c0_4 = arith.constant 0 : index
    %4 = vector.load %arg3[%c0_3, %c0_4] : memref<1x384xf32, #tpu.memory_space<vmem>>, vector<1x384xf32>
    %5 = vector.broadcast %4 : vector<1x384xf32> to vector<8x384xf32>
    %6 = arith.addf %3, %5 : vector<8x384xf32>
    %cst_5 = arith.constant 0.000000e+00 : f32
    %7 = vector.broadcast %cst_5 : f32 to vector<8x384xf32>
    %8 = arith.maximumf %6, %7 : vector<8x384xf32>
    %9 = arith.truncf %8 : vector<8x384xf32> to vector<8x384xbf16>
    %c0_6 = arith.constant 0 : index
    %c0_7 = arith.constant 0 : index
    %10 = vector.load %arg4[%c0_6, %c0_7] : memref<384x640xbf16, #tpu.memory_space<vmem>>, vector<384x640xbf16>
    %cst_8 = arith.constant dense<0.000000e+00> : vector<8x640xf32>
    %11 = tpu.matmul %9, %10, %cst_8 {dimension_numbers = #tpu.dot_dimension_numbers<[1], [0], [0], [1], [0, 0, 1, 1], [], []>} : vector<8x384xbf16>, vector<384x640xbf16>, vector<8x640xf32> -> vector<8x640xf32>
    %c0_9 = arith.constant 0 : index
    %c0_10 = arith.constant 0 : index
    %12 = vector.load %arg5[%c0_9, %c0_10] : memref<1x640xf32, #tpu.memory_space<vmem>>, vector<1x640xf32>
    %13 = vector.broadcast %12 : vector<1x640xf32> to vector<8x640xf32>
    %14 = arith.addf %11, %13 : vector<8x640xf32>
    %cst_11 = arith.constant 0.000000e+00 : f32
    %15 = vector.broadcast %cst_11 : f32 to vector<8x640xf32>
    %16 = arith.maximumf %14, %15 : vector<8x640xf32>
    %17 = arith.truncf %16 : vector<8x640xf32> to vector<8x640xbf16>
    %c0_12 = arith.constant 0 : index
    %c0_13 = arith.constant 0 : index
    %18 = vector.load %arg6[%c0_12, %c0_13] : memref<640x128xbf16, #tpu.memory_space<vmem>>, vector<640x128xbf16>
    %cst_14 = arith.constant dense<0.000000e+00> : vector<8x128xf32>
    %19 = tpu.matmul %17, %18, %cst_14 {dimension_numbers = #tpu.dot_dimension_numbers<[1], [0], [0], [1], [0, 0, 1, 1], [], []>} : vector<8x640xbf16>, vector<640x128xbf16>, vector<8x128xf32> -> vector<8x128xf32>
    %c0_15 = arith.constant 0 : index
    %c0_16 = arith.constant 0 : index
    %20 = vector.load %arg7[%c0_15, %c0_16] : memref<1x128xf32, #tpu.memory_space<vmem>>, vector<1x128xf32>
    %21 = vector.broadcast %20 : vector<1x128xf32> to vector<8x128xf32>
    %22 = arith.addf %19, %21 : vector<8x128xf32>
    %c0_17 = arith.constant 0 : index
    %c0_18 = arith.constant 0 : index
    %23 = vector.load %arg8[%c0_17, %c0_18] : memref<8x128xf32, #tpu.memory_space<vmem>>, vector<8x128xf32>
    tpu.vector_store %arg8[%c0_17, %c0_18], %22 {strides = array<i32>} : memref<8x128xf32, #tpu.memory_space<vmem>>, vector<8x128xf32>,
    return
  }
  func.func @transform_0(%arg0: i32) -> (i32, i32) {
    %c0_i32 = arith.constant 0 : i32
    %c0_i32_0 = arith.constant 0 : i32
    return %arg0, %c0_i32 : i32, i32
  }
  func.func @transform_1(%arg0: i32) -> (i32, i32) {
    %c0_i32 = arith.constant 0 : i32
    %c0_i32_0 = arith.constant 0 : i32
    %c0_i32_1 = arith.constant 0 : i32
    return %c0_i32, %c0_i32_0 : i32, i32
  }
  func.func @transform_2(%arg0: i32) -> (i32, i32) {
    %c0_i32 = arith.constant 0 : i32
    %c0_i32_0 = arith.constant 0 : i32
    %c0_i32_1 = arith.constant 0 : i32
    return %c0_i32, %c0_i32_0 : i32, i32
  }
  func.func @transform_3(%arg0: i32) -> (i32, i32) {
    %c0_i32 = arith.constant 0 : i32
    %c0_i32_0 = arith.constant 0 : i32
    %c0_i32_1 = arith.constant 0 : i32
    return %c0_i32, %c0_i32_0 : i32, i32
  }
  func.func @transform_4(%arg0: i32) -> (i32, i32) {
    %c0_i32 = arith.constant 0 : i32
    %c0_i32_0 = arith.constant 0 : i32
    %c0_i32_1 = arith.constant 0 : i32
    return %c0_i32, %c0_i32_0 : i32, i32
  }
  func.func @transform_5(%arg0: i32) -> (i32, i32) {
    %c0_i32 = arith.constant 0 : i32
    %c0_i32_0 = arith.constant 0 : i32
    %c0_i32_1 = arith.constant 0 : i32
    return %c0_i32, %c0_i32_0 : i32, i32
  }
  func.func @transform_6(%arg0: i32) -> (i32, i32) {
    %c0_i32 = arith.constant 0 : i32
    %c0_i32_0 = arith.constant 0 : i32
    %c0_i32_1 = arith.constant 0 : i32
    return %c0_i32, %c0_i32_0 : i32, i32
  }
  func.func @transform_7(%arg0: i32) -> (i32, i32) {
    %c0_i32 = arith.constant 0 : i32
    %c0_i32_0 = arith.constant 0 : i32
    return %arg0, %c0_i32 : i32, i32
  }
}

</mosaic_0001>

<llo_original>
// kernel: tpu_custom_call.1
$region0: #{tpu_custom_call.1}
  #allocation0 [shape = 'u32[]', space=smem, size = 0x4, offset = 0x4, fixed_abs, tag = 'smem constant byte address 0x4 - core index']
  #allocation1 [shape = 'u32[144,128]{1,0:T(1,128)}', space=vmem, size = 0x12000, scoped, tag = 'internal scratch']
  %s0 = inlined_call_operand.hbm [shape: f32[8,29], index: 0, kind: input, shape index: {}]
  %s1 = inlined_call_operand.hbm [shape: bf16[29,384], index: 1, kind: input, shape index: {}]
  %s2 = inlined_call_operand.vmem [shape: f32[1,384], index: 2, kind: input, shape index: {}]
  %s3 = inlined_call_operand.hbm [shape: bf16[384,640], index: 3, kind: input, shape index: {}]
  %s4 = inlined_call_operand.vmem [shape: f32[1,640], index: 4, kind: input, shape index: {}]
  %s5 = inlined_call_operand.hbm [shape: bf16[640,128], index: 5, kind: input, shape index: {}]
  %s6 = inlined_call_operand.vmem [shape: f32[1,128], index: 6, kind: input, shape index: {}]
  %s7 = inlined_call_operand.hbm [shape: f32[8,128], index: 7, kind: output, shape index: {}]
  %s8 = sld [smem:[#allocation0]]
  $region54: #{tpu_custom_call.1} parent=0
    _
  %s10 = ssub.s32 1, %s8
  %s11 = scalar_select 0, %s10, %s8
  $region1: #{tpu_custom_call.1} parent=0
    #allocation2 [shape = 'u8[4096]{0}', space=vmem, size = 0x1000, scoped, tag = 'input window, operand 0, single buffered']
    #allocation3 [shape = 's32[1]{0}', space=sflag, size = 0x4, scoped, tag = 'scoped memory for tpu_custom_call.1']
    #allocation4 [shape = 's32[1]{0}', space=sflag, size = 0x4, scoped, tag = 'scoped memory for tpu_custom_call.1']
    #allocation5 [shape = 'u8[24576]{0}', space=vmem, size = 0x6000, scoped, tag = 'input window, operand 1, single buffered']
    #allocation6 [shape = 's32[1]{0}', space=sflag, size = 0x4, scoped, tag = 'scoped memory for tpu_custom_call.1']
    #allocation7 [shape = 'u8[491520]{0}', space=vmem, size = 0x78000, scoped, tag = 'input window, operand 3, single buffered']
    #allocation8 [shape = 'u8[163840]{0}', space=vmem, size = 0x28000, scoped, tag = 'input window, operand 5, single buffered']
    #allocation9 [shape = 's32[1]{0}', space=sflag, size = 0x4, scoped, tag = 'scoped memory for tpu_custom_call.1']
    #allocation10 [shape = 'u8[4096]{0}', space=vmem, size = 0x1000, scoped, tag = 'output window, operand 0, single buffered']
    %12 = vsyncpa [#allocation3], 0
    %13 = vsyncpa [#allocation6], 0
    %14 = vsyncpa [#allocation9], 0
    %15 = vsyncpa [#allocation4], 0
    // Predicated region
    $region2: #{tpu_custom_call.1} parent=1 // pred_check
      _
    $region3: #{tpu_custom_call.1} parent=1 // pred_check_branch
      %17 = sbr.rel (0) target = $region5
    $region4: #{tpu_custom_call.1} parent=1 // pred_region
      %s19 = ssub.s32 128, 128
      %20 = vsyncadd [#allocation3], %s19
      %s22 = sshll.u32 [#allocation2], 4
      %s23 = int_to_ptr.vmem [resolvable:$true] %s22
      %25 = dma.hbm_to_vmem [thread:$0]  %s0, 128, %s23, [#allocation3]
    $region5: #{tpu_custom_call.1} parent=1 // pred_fallthru
      _
    // Predicated region
    $region6: #{tpu_custom_call.1} parent=1 // pred_check
      _
    $region7: #{tpu_custom_call.1} parent=1 // pred_check_branch
      %27 = sbr.rel (0) target = $region9
    $region8: #{tpu_custom_call.1} parent=1 // pred_region
      %s29 = ssub.s32 768, 768
      %30 = vsyncadd [#allocation6], %s29
      %s31 = sshll.u32 [#allocation5], 4
      %s32 = int_to_ptr.vmem [resolvable:$true] %s31
      %37 = dma.hbm_to_vmem [thread:$0]  %s1, 768, %s32, [#allocation6], 192, 192, 12
    $region9: #{tpu_custom_call.1} parent=1 // pred_fallthru
      _
    // Predicated region
    $region10: #{tpu_custom_call.1} parent=1 // pred_check
      _
    $region11: #{tpu_custom_call.1} parent=1 // pred_check_branch
      %39 = sbr.rel (0) target = $region13
    $region12: #{tpu_custom_call.1} parent=1 // pred_region
      _
    $region13: #{tpu_custom_call.1} parent=1 // pred_fallthru
      _
    // Predicated region
    $region14: #{tpu_custom_call.1} parent=1 // pred_check
      _
    $region15: #{tpu_custom_call.1} parent=1 // pred_check_branch
      %41 = sbr.rel (0) target = $region17
    $region16: #{tpu_custom_call.1} parent=1 // pred_region
      %s43 = ssub.s32 15360, 15360
      %44 = vsyncadd [#allocation6], %s43
      %s45 = sshll.u32 [#allocation7], 4
      %s46 = int_to_ptr.vmem [resolvable:$true] %s45
      %51 = dma.hbm_to_vmem [thread:$0]  %s3, 15360, %s46, [#allocation6], 320, 320, 20
    $region17: #{tpu_custom_call.1} parent=1 // pred_fallthru
      _
    // Predicated region
    $region18: #{tpu_custom_call.1} parent=1 // pred_check
      _
    $region19: #{tpu_custom_call.1} parent=1 // pred_check_branch
      %53 = sbr.rel (0) target = $region21
    $region20: #{tpu_custom_call.1} parent=1 // pred_region
      _
    $region21: #{tpu_custom_call.1} parent=1 // pred_fallthru
      _
    // Predicated region
    $region22: #{tpu_custom_call.1} parent=1 // pred_check
      _
    $region23: #{tpu_custom_call.1} parent=1 // pred_check_branch
      %55 = sbr.rel (0) target = $region25
    $region24: #{tpu_custom_call.1} parent=1 // pred_region
      %s57 = ssub.s32 5120, 5120
      %58 = vsyncadd [#allocation9], %s57
      %s59 = sshll.u32 [#allocation8], 4
      %s60 = int_to_ptr.vmem [resolvable:$true] %s59
      %65 = dma.hbm_to_vmem [thread:$0]  %s5, 5120, %s60, [#allocation9], 64, 64, 4
    $region25: #{tpu_custom_call.1} parent=1 // pred_fallthru
      _
    // Predicated region
    $region26: #{tpu_custom_call.1} parent=1 // pred_check
      _
    $region27: #{tpu_custom_call.1} parent=1 // pred_check_branch
      %67 = sbr.rel (0) target = $region29
    $region28: #{tpu_custom_call.1} parent=1 // pred_region
      _
    $region29: #{tpu_custom_call.1} parent=1 // pred_fallthru
      _
    // Predicated region
    $region30: #{tpu_custom_call.1} parent=1 // pred_check
      _
    $region31: #{tpu_custom_call.1} parent=1 // pred_check_branch
      %69 = sbr.rel (0) target = $region33
    $region32: #{tpu_custom_call.1} parent=1 // pred_region
      %70 = dma.done [#allocation3], 128
    $region33: #{tpu_custom_call.1} parent=1 // pred_fallthru
      _
    // Predicated region
    $region34: #{tpu_custom_call.1} parent=1 // pred_check
      _
    $region35: #{tpu_custom_call.1} parent=1 // pred_check_branch
      %72 = sbr.rel (0) target = $region37
    $region36: #{tpu_custom_call.1} parent=1 // pred_region
      %73 = dma.done [#allocation6], 768
    $region37: #{tpu_custom_call.1} parent=1 // pred_fallthru
      _
    // Predicated region
    $region38: #{tpu_custom_call.1} parent=1 // pred_check
      _
    $region39: #{tpu_custom_call.1} parent=1 // pred_check_branch
      %75 = sbr.rel (0) target = $region41
    $region40: #{tpu_custom_call.1} parent=1 // pred_region
      %76 = dma.done [#allocation6], 15360
    $region41: #{tpu_custom_call.1} parent=1 // pred_fallthru
      _
    // Predicated region
    $region42: #{tpu_custom_call.1} parent=1 // pred_check
      _
    $region43: #{tpu_custom_call.1} parent=1 // pred_check_branch
      %78 = sbr.rel (0) target = $region45
    $region44: #{tpu_custom_call.1} parent=1 // pred_region
      %79 = dma.done [#allocation9], 5120
    $region45: #{tpu_custom_call.1} parent=1 // pred_fallthru
      _
    %v81 = vld [vmem:[#allocation2] sm:$0xff]
    %v82 = vpack.c.bf16 %v81, %v81
    %v83 = vld [vmem:[#allocation5] sm:$0xff]
    %v84 = vld [vmem:[#allocation5 + $0x8] sm:$0xf]
    %v85 = vld [vmem:[#allocation5 + $0xc] sm:$0xff]
    %v86 = vld [vmem:[#allocation5 + $0x14] sm:$0xf]
    %v87 = vld [vmem:[#allocation5 + $0x18] sm:$0xff]
    %v88 = vld [vmem:[#allocation5 + $0x20] sm:$0xf]
    %v89 = vld [vmem:[#allocation5 + $0x24] sm:$0x77]
    %v90 = vld [vmem:[#allocation5 + $0x2c] sm:$0x7]
    %v91 = vld [vmem:[%s2] sm:$0x7]
    %v93 = vlaneseq
    %v94 = vshrl.u32 %v93, 7
    %v95 = vsub.s32 0, %v94
    %v96 = vrot.slane %v91, %v95
    %v97 = vlaneseq
    %v98 = vshrl.u32 %v97, 7
    %v99 = vsub.s32 1, %v98
    %v100 = vrot.slane %v91, %v99
    %v101 = vlaneseq
    %v102 = vshrl.u32 %v101, 7
    %v103 = vsub.s32 2, %v102
    %v104 = vrot.slane %v91, %v103
    %v116 = vunpack.c.l.b16 %v83
    %v117 = vunpack.c.h.b16 %v83
    %v118 = vunpack.c.l.b16 %v84
    %v119 = vunpack.c.l.b16 %v85
    %v120 = vunpack.c.h.b16 %v85
    %v121 = vunpack.c.l.b16 %v86
    %v122 = vunpack.c.l.b16 %v87
    %v123 = vunpack.c.h.b16 %v87
    %v124 = vunpack.c.l.b16 %v88
    %v125 = vunpack.c.l.b16 %v89
    %v126 = vunpack.c.h.b16 %v89
    %v127 = vunpack.c.l.b16 %v90
    %v128 = vpack.c.b16 %v119, %v116
    %v129 = vpack.c.b16 %v120, %v117
    %v130 = vpack.c.b16 %v121, %v118
    %v131 = vpack.c.b16 %v125, %v122
    %v132 = vpack.c.b16 %v126, %v123
    %v133 = vpack.c.b16 %v127, %v124
    %vm137 = vcmask 236544
    %v139 = vsel %vm137, %v82, 0
    %vm141 = vcmask 1045504
    %vm142 = vcmask 1046528
    %v143 = vsel %vm141, 4294967295, 65535
    %v144 = vsel %vm142, %v143, 0
    %v146 = vand.u32 %v131, %v144
    %v149 = vand.u32 %v132, %v144
    %v152 = vand.u32 %v133, %v144
    %154 = vmatprep.subr.bf16.mxu0 %v129
    %155 = vmatpush1.bf16.msra.mxu0 %v128
    %156 = vmatprep.subr.bf16.mxu0 %v149
    %157 = vmatpush1.bf16.msra.mxu0 %v146
    %158 = vmatprep.subr.bf16.mxu0 0
    %159 = vmatpush1.bf16.msra.mxu0 0
    %160 = vmatprep.subr.bf16.mxu0 0
    %161 = vmatpush1.bf16.msra.mxu0 0
    %162 = vmatprep.subr.bf16.mxu0 0
    %163 = vmatpush1.bf16.msra.mxu0 0
    %164 = vmatprep.subr.bf16.mxu0 0
    %165 = vmatpush1.bf16.msra.mxu0 0
    %166 = vmatprep.subr.bf16.mxu0 0
    %167 = vmatpush1.bf16.msra.mxu0 0
    %168 = vmatprep.subr.bf16.mxu0 0
    %169 = vmatpush1.bf16.msra.mxu0 0
    %170 = vmatprep.subr.bf16.mxu0 0
    %171 = vmatpush1.bf16.msra.mxu0 0
    %172 = vmatprep.subr.bf16.mxu0 0
    %173 = vmatpush1.bf16.msra.mxu0 0
    %174 = vmatprep.subr.bf16.mxu0 0
    %175 = vmatpush1.bf16.msra.mxu0 0
    %176 = vmatprep.subr.bf16.mxu0 0
    %177 = vmatpush1.bf16.msra.mxu0 0
    %178 = vmatprep.subr.bf16.mxu0 0
    %179 = vmatpush1.bf16.msra.mxu0 0
    %180 = vmatprep.subr.bf16.mxu0 0
    %181 = vmatpush1.bf16.msra.mxu0 0
    %182 = vmatprep.subr.bf16.mxu0 0
    %183 = vmatpush1.bf16.msra.mxu0 0
    %184 = vmatprep.subr.bf16.mxu0 0
    %185 = vmatpush1.bf16.msra.mxu0 0
    %186 = vmatprep.mubr.bf16.mxu0 0
    %187 = vmatmul.mubr.bf16.gmra.mrb[0].mxu0 %v139
    %v188 = vpop.f32.mrb[0].mxu0
    %v189 = vadd.f32 %v96, %v188
    %v190 = vpop.f32.mrb[0].mxu0
    %v191 = vadd.f32 %v100, %v190
    %v192 = vpop.f32.mrb[0].mxu0
    %v193 = vpop.f32.mrb[0].mxu0
    %194 = vdwg.mxu0
    %195 = vmatprep.subr.bf16.mxu0 0
    %196 = vmatpush1.bf16.msra.mxu0 %v130
    %197 = vmatprep.subr.bf16.mxu0 0
    %198 = vmatpush1.bf16.msra.mxu0 %v152
    %199 = vmatprep.subr.bf16.mxu0 0
    %200 = vmatpush1.bf16.msra.mxu0 0
    %201 = vmatprep.subr.bf16.mxu0 0
    %202 = vmatpush1.bf16.msra.mxu0 0
    %203 = vmatprep.subr.bf16.mxu0 0
    %204 = vmatpush1.bf16.msra.mxu0 0
    %205 = vmatprep.subr.bf16.mxu0 0
    %206 = vmatpush1.bf16.msra.mxu0 0
    %207 = vmatprep.subr.bf16.mxu0 0
    %208 = vmatpush1.bf16.msra.mxu0 0
    %209 = vmatprep.subr.bf16.mxu0 0
    %210 = vmatpush1.bf16.msra.mxu0 0
    %211 = vmatprep.subr.bf16.mxu0 0
    %212 = vmatpush1.bf16.msra.mxu0 0
    %213 = vmatprep.subr.bf16.mxu0 0
    %214 = vmatpush1.bf16.msra.mxu0 0
    %215 = vmatprep.subr.bf16.mxu0 0
    %216 = vmatpush1.bf16.msra.mxu0 0
    %217 = vmatprep.subr.bf16.mxu0 0
    %218 = vmatpush1.bf16.msra.mxu0 0
    %219 = vmatprep.subr.bf16.mxu0 0
    %220 = vmatpush1.bf16.msra.mxu0 0
    %221 = vmatprep.subr.bf16.mxu0 0
    %222 = vmatpush1.bf16.msra.mxu0 0
    %223 = vmatprep.subr.bf16.mxu0 0
    %224 = vmatpush1.bf16.msra.mxu0 0
    %225 = vmatprep.subr.bf16.mxu0 0
    %226 = vmatpush1.bf16.msra.mxu0 0
    %227 = vmatprep.mubr.bf16.mxu0 0
    %228 = vmatmul.mubr.bf16.gmra.mrb[0].mxu0 %v139
    %v229 = vpop.f32.mrb[0].mxu0
    %v230 = vadd.f32 %v104, %v229
    %v231 = vpop.f32.mrb[0].mxu0
    %v232 = vpop.f32.mrb[0].mxu0
    %v233 = vpop.f32.mrb[0].mxu0
    %234 = vdwg.mxu0
    %v235 = vmax.f32 %v189, 0.0
    %v236 = vmax.f32 %v191, 0.0
    %v237 = vmax.f32 %v230, 0.0
    %v238 = vpack.c.bf16 %v235, %v235
    %v239 = vpack.c.bf16 %v236, %v236
    %v240 = vpack.c.bf16 %v237, %v237
    %v241 = vld [vmem:[#allocation7] sm:$0xff]
    %v242 = vld [vmem:[#allocation7 + $0x8] sm:$0xff]
    %v243 = vld [vmem:[#allocation7 + $0x10] sm:$0xf]
    %v244 = vld [vmem:[#allocation7 + $0x14] sm:$0xff]
    %v245 = vld [vmem:[#allocation7 + $0x1c] sm:$0xff]
    %v246 = vld [vmem:[#allocation7 + $0x24] sm:$0xf]
    %v247 = vld [vmem:[#allocation7 + $0x28] sm:$0xff]
    %v248 = vld [vmem:[#allocation7 + $0x30] sm:$0xff]
    %v249 = vld [vmem:[#allocation7 + $0x38] sm:$0xf]
    %v250 = vld [vmem:[#allocation7 + $0x3c] sm:$0xff]
    %v251 = vld [vmem:[#allocation7 + $0x44] sm:$0xff]
    %v252 = vld [vmem:[#allocation7 + $0x4c] sm:$0xf]
    %v253 = vld [vmem:[#allocation7 + $0x50] sm:$0xff]
    %v254 = vld [vmem:[#allocation7 + $0x58] sm:$0xff]
    %v255 = vld [vmem:[#allocation7 + $0x60] sm:$0xf]
    %v256 = vld [vmem:[#allocation7 + $0x64] sm:$0xff]
    %v257 = vld [vmem:[#allocation7 + $0x6c] sm:$0xff]
    %v258 = vld [vmem:[#allocation7 + $0x74] sm:$0xf]
    %v259 = vld [vmem:[#allocation7 + $0x78] sm:$0xff]
    %v260 = vld [vmem:[#allocation7 + $0x80] sm:$0xff]
    %v261 = vld [vmem:[#allocation7 + $0x88] sm:$0xf]
    %v262 = vld [vmem:[#allocation7 + $0x8c] sm:$0xff]
    %v263 = vld [vmem:[#allocation7 + $0x94] sm:$0xff]
    %v264 = vld [vmem:[#allocation7 + $0x9c] sm:$0xf]
    %v265 = vld [vmem:[#allocation7 + $0xa0] sm:$0xff]
    %v266 = vld [vmem:[#allocation7 + $0xa8] sm:$0xff]
    %v267 = vld [vmem:[#allocation7 + $0xb0] sm:$0xf]
    %v268 = vld [vmem:[#allocation7 + $0xb4] sm:$0xff]
    %v269 = vld [vmem:[#allocation7 + $0xbc] sm:$0xff]
    %v270 = vld [vmem:[#allocation7 + $0xc4] sm:$0xf]
    %v271 = vld [vmem:[#allocation7 + $0xc8] sm:$0xff]
    %v272 = vld [vmem:[#allocation7 + $0xd0] sm:$0xff]
    %v273 = vld [vmem:[#allocation7 + $0xd8] sm:$0xf]
    %v274 = vld [vmem:[#allocation7 + $0xdc] sm:$0xff]
    %v275 = vld [vmem:[#allocation7 + $0xe4] sm:$0xff]
    %v276 = vld [vmem:[#allocation7 + $0xec] sm:$0xf]
    %v277 = vld [vmem:[#allocation7 + $0xf0] sm:$0xff]
    %v278 = vld [vmem:[#allocation7 + $0xf8] sm:$0xff]
    %v279 = vld [vmem:[#allocation7 + $0x100] sm:$0xf]
    %v280 = vld [vmem:[#allocation7 + $0x104] sm:$0xff]
    %v281 = vld [vmem:[#allocation7 + $0x10c] sm:$0xff]
    %v282 = vld [vmem:[#allocation7 + $0x114] sm:$0xf]
    %v283 = vld [vmem:[#allocation7 + $0x118] sm:$0xff]
    %v284 = vld [vmem:[#allocation7 + $0x120] sm:$0xff]
    %v285 = vld [vmem:[#allocation7 + $0x128] sm:$0xf]
    %v286 = vld [vmem:[#allocation7 + $0x12c] sm:$0xff]
    %v287 = vld [vmem:[#allocation7 + $0x134] sm:$0xff]
    %v288 = vld [vmem:[#allocation7 + $0x13c] sm:$0xf]
    %v289 = vld [vmem:[#allocation7 + $0x140] sm:$0xff]
    %v290 = vld [vmem:[#allocation7 + $0x148] sm:$0xff]
    %v291 = vld [vmem:[#allocation7 + $0x150] sm:$0xf]
    %v292 = vld [vmem:[#allocation7 + $0x154] sm:$0xff]
    %v293 = vld [vmem:[#allocation7 + $0x15c] sm:$0xff]
    %v294 = vld [vmem:[#allocation7 + $0x164] sm:$0xf]
    %v295 = vld [vmem:[#allocation7 + $0x168] sm:$0xff]
    %v296 = vld [vmem:[#allocation7 + $0x170] sm:$0xff]
    %v297 = vld [vmem:[#allocation7 + $0x178] sm:$0xf]
    %v298 = vld [vmem:[#allocation7 + $0x17c] sm:$0xff]
    %v299 = vld [vmem:[#allocation7 + $0x184] sm:$0xff]
    %v300 = vld [vmem:[#allocation7 + $0x18c] sm:$0xf]
    %v301 = vld [vmem:[#allocation7 + $0x190] sm:$0xff]
    %v302 = vld [vmem:[#allocation7 + $0x198] sm:$0xff]
    %v303 = vld [vmem:[#allocation7 + $0x1a0] sm:$0xf]
    %v304 = vld [vmem:[#allocation7 + $0x1a4] sm:$0xff]
    %v305 = vld [vmem:[#allocation7 + $0x1ac] sm:$0xff]
    %v306 = vld [vmem:[#allocation7 + $0x1b4] sm:$0xf]
    %v307 = vld [vmem:[#allocation7 + $0x1b8] sm:$0xff]
    %v308 = vld [vmem:[#allocation7 + $0x1c0] sm:$0xff]
    %v309 = vld [vmem:[#allocation7 + $0x1c8] sm:$0xf]
    %v310 = vld [vmem:[#allocation7 + $0x1cc] sm:$0xff]
    %v311 = vld [vmem:[#allocation7 + $0x1d4] sm:$0xff]
    %v312 = vld [vmem:[#allocation7 + $0x1dc] sm:$0xf]
    %v313 = vld [vmem:[#allocation7 + $0x1e0] sm:$0xff]
    %v314 = vld [vmem:[#allocation7 + $0x1e8] sm:$0xff]
    %v315 = vld [vmem:[#allocation7 + $0x1f0] sm:$0xf]
    %v316 = vld [vmem:[#allocation7 + $0x1f4] sm:$0xff]
    %v317 = vld [vmem:[#allocation7 + $0x1fc] sm:$0xff]
    %v318 = vld [vmem:[#allocation7 + $0x204] sm:$0xf]
    %v319 = vld [vmem:[#allocation7 + $0x208] sm:$0xff]
    %v320 = vld [vmem:[#allocation7 + $0x210] sm:$0xff]
    %v321 = vld [vmem:[#allocation7 + $0x218] sm:$0xf]
    %v322 = vld [vmem:[#allocation7 + $0x21c] sm:$0xff]
    %v323 = vld [vmem:[#allocation7 + $0x224] sm:$0xff]
    %v324 = vld [vmem:[#allocation7 + $0x22c] sm:$0xf]
    %v325 = vld [vmem:[#allocation7 + $0x230] sm:$0xff]
    %v326 = vld [vmem:[#allocation7 + $0x238] sm:$0xff]
    %v327 = vld [vmem:[#allocation7 + $0x240] sm:$0xf]
    %v328 = vld [vmem:[#allocation7 + $0x244] sm:$0xff]
    %v329 = vld [vmem:[#allocation7 + $0x24c] sm:$0xff]
    %v330 = vld [vmem:[#allocation7 + $0x254] sm:$0xf]
    %v331 = vld [vmem:[#allocation7 + $0x258] sm:$0xff]
    %v332 = vld [vmem:[#allocation7 + $0x260] sm:$0xff]
    %v333 = vld [vmem:[#allocation7 + $0x268] sm:$0xf]
    %v334 = vld [vmem:[#allocation7 + $0x26c] sm:$0xff]
    %v335 = vld [vmem:[#allocation7 + $0x274] sm:$0xff]
    %v336 = vld [vmem:[#allocation7 + $0x27c] sm:$0xf]
    %v337 = vld [vmem:[#allocation7 + $0x280] sm:$0xff]
    %v338 = vld [vmem:[#allocation7 + $0x288] sm:$0xff]
    %v339 = vld [vmem:[#allocation7 + $0x290] sm:$0xf]
    %v340 = vld [vmem:[#allocation7 + $0x294] sm:$0xff]
    %v341 = vld [vmem:[#allocation7 + $0x29c] sm:$0xff]
    %v342 = vld [vmem:[#allocation7 + $0x2a4] sm:$0xf]
    %v343 = vld [vmem:[#allocation7 + $0x2a8] sm:$0xff]
    %v344 = vld [vmem:[#allocation7 + $0x2b0] sm:$0xff]
    %v345 = vld [vmem:[#allocation7 + $0x2b8] sm:$0xf]
    %v346 = vld [vmem:[#allocation7 + $0x2bc] sm:$0xff]
    %v347 = vld [vmem:[#allocation7 + $0x2c4] sm:$0xff]
    %v348 = vld [vmem:[#allocation7 + $0x2cc] sm:$0xf]
    %v349 = vld [vmem:[#allocation7 + $0x2d0] sm:$0xff]
    %v350 = vld [vmem:[#allocation7 + $0x2d8] sm:$0xff]
    %v351 = vld [vmem:[#allocation7 + $0x2e0] sm:$0xf]
    %v352 = vld [vmem:[#allocation7 + $0x2e4] sm:$0xff]
    %v353 = vld [vmem:[#allocation7 + $0x2ec] sm:$0xff]
    %v354 = vld [vmem:[#allocation7 + $0x2f4] sm:$0xf]
    %v355 = vld [vmem:[#allocation7 + $0x2f8] sm:$0xff]
    %v356 = vld [vmem:[#allocation7 + $0x300] sm:$0xff]
    %v357 = vld [vmem:[#allocation7 + $0x308] sm:$0xf]
    %v358 = vld [vmem:[#allocation7 + $0x30c] sm:$0xff]
    %v359 = vld [vmem:[#allocation7 + $0x314] sm:$0xff]
    %v360 = vld [vmem:[#allocation7 + $0x31c] sm:$0xf]
    %v361 = vld [vmem:[#allocation7 + $0x320] sm:$0xff]
    %v362 = vld [vmem:[#allocation7 + $0x328] sm:$0xff]
    %v363 = vld [vmem:[#allocation7 + $0x330] sm:$0xf]
    %v364 = vld [vmem:[#allocation7 + $0x334] sm:$0xff]
    %v365 = vld [vmem:[#allocation7 + $0x33c] sm:$0xff]
    %v366 = vld [vmem:[#allocation7 + $0x344] sm:$0xf]
    %v367 = vld [vmem:[#allocation7 + $0x348] sm:$0xff]
    %v368 = vld [vmem:[#allocation7 + $0x350] sm:$0xff]
    %v369 = vld [vmem:[#allocation7 + $0x358] sm:$0xf]
    %v370 = vld [vmem:[#allocation7 + $0x35c] sm:$0xff]
    %v371 = vld [vmem:[#allocation7 + $0x364] sm:$0xff]
    %v372 = vld [vmem:[#allocation7 + $0x36c] sm:$0xf]
    %v373 = vld [vmem:[#allocation7 + $0x370] sm:$0xff]
    %v374 = vld [vmem:[#allocation7 + $0x378] sm:$0xff]
    %v375 = vld [vmem:[#allocation7 + $0x380] sm:$0xf]
    %v376 = vld [vmem:[#allocation7 + $0x384] sm:$0xff]
    %v377 = vld [vmem:[#allocation7 + $0x38c] sm:$0xff]
    %v378 = vld [vmem:[#allocation7 + $0x394] sm:$0xf]
    %v379 = vld [vmem:[#allocation7 + $0x398] sm:$0xff]
    %v380 = vld [vmem:[#allocation7 + $0x3a0] sm:$0xff]
    %v381 = vld [vmem:[#allocation7 + $0x3a8] sm:$0xf]
    %v382 = vld [vmem:[#allocation7 + $0x3ac] sm:$0xff]
    %v383 = vld [vmem:[#allocation7 + $0x3b4] sm:$0xff]
    %v384 = vld [vmem:[#allocation7 + $0x3bc] sm:$0xf]
    %v385 = vld [vmem:[%s4] sm:$0x1f]
    %v387 = vlaneseq
    %v388 = vshrl.u32 %v387, 7
    %v389 = vsub.s32 0, %v388
    %v390 = vrot.slane %v385, %v389
    %v391 = vlaneseq
    %v392 = vshrl.u32 %v391, 7
    %v393 = vsub.s32 1, %v392
    %v394 = vrot.slane %v385, %v393
    %v395 = vlaneseq
    %v396 = vshrl.u32 %v395, 7
    %v397 = vsub.s32 2, %v396
    %v398 = vrot.slane %v385, %v397
    %v399 = vlaneseq
    %v400 = vshrl.u32 %v399, 7
    %v401 = vsub.s32 3, %v400
    %v402 = vrot.slane %v385, %v401
    %v403 = vlaneseq
    %v404 = vshrl.u32 %v403, 7
    %v405 = vsub.s32 4, %v404
    %v406 = vrot.slane %v385, %v405
    %v556 = vunpack.c.l.b16 %v241
    %v557 = vunpack.c.h.b16 %v241
    %v558 = vunpack.c.l.b16 %v242
    %v559 = vunpack.c.h.b16 %v242
    %v560 = vunpack.c.l.b16 %v243
    %v561 = vunpack.c.l.b16 %v244
    %v562 = vunpack.c.h.b16 %v244
    %v563 = vunpack.c.l.b16 %v245
    %v564 = vunpack.c.h.b16 %v245
    %v565 = vunpack.c.l.b16 %v246
    %v566 = vunpack.c.l.b16 %v247
    %v567 = vunpack.c.h.b16 %v247
    %v568 = vunpack.c.l.b16 %v248
    %v569 = vunpack.c.h.b16 %v248
    %v570 = vunpack.c.l.b16 %v249
    %v571 = vunpack.c.l.b16 %v250
    %v572 = vunpack.c.h.b16 %v250
    %v573 = vunpack.c.l.b16 %v251
    %v574 = vunpack.c.h.b16 %v251
    %v575 = vunpack.c.l.b16 %v252
    %v576 = vunpack.c.l.b16 %v253
    %v577 = vunpack.c.h.b16 %v253
    %v578 = vunpack.c.l.b16 %v254
    %v579 = vunpack.c.h.b16 %v254
    %v580 = vunpack.c.l.b16 %v255
    %v581 = vunpack.c.l.b16 %v256
    %v582 = vunpack.c.h.b16 %v256
    %v583 = vunpack.c.l.b16 %v257
    %v584 = vunpack.c.h.b16 %v257
    %v585 = vunpack.c.l.b16 %v258
    %v586 = vunpack.c.l.b16 %v259
    %v587 = vunpack.c.h.b16 %v259
    %v588 = vunpack.c.l.b16 %v260
    %v589 = vunpack.c.h.b16 %v260
    %v590 = vunpack.c.l.b16 %v261
    %v591 = vunpack.c.l.b16 %v262
    %v592 = vunpack.c.h.b16 %v262
    %v593 = vunpack.c.l.b16 %v263
    %v594 = vunpack.c.h.b16 %v263
    %v595 = vunpack.c.l.b16 %v264
    %v596 = vunpack.c.l.b16 %v265
    %v597 = vunpack.c.h.b16 %v265
    %v598 = vunpack.c.l.b16 %v266
    %v599 = vunpack.c.h.b16 %v266
    %v600 = vunpack.c.l.b16 %v267
    %v601 = vunpack.c.l.b16 %v268
    %v602 = vunpack.c.h.b16 %v268
    %v603 = vunpack.c.l.b16 %v269
    %v604 = vunpack.c.h.b16 %v269
    %v605 = vunpack.c.l.b16 %v270
    %v606 = vunpack.c.l.b16 %v271
    %v607 = vunpack.c.h.b16 %v271
    %v608 = vunpack.c.l.b16 %v272
    %v609 = vunpack.c.h.b16 %v272
    %v610 = vunpack.c.l.b16 %v273
    %v611 = vunpack.c.l.b16 %v274
    %v612 = vunpack.c.h.b16 %v274
    %v613 = vunpack.c.l.b16 %v275
    %v614 = vunpack.c.h.b16 %v275
    %v615 = vunpack.c.l.b16 %v276
    %v616 = vunpack.c.l.b16 %v277
    %v617 = vunpack.c.h.b16 %v277
    %v618 = vunpack.c.l.b16 %v278
    %v619 = vunpack.c.h.b16 %v278
    %v620 = vunpack.c.l.b16 %v279
    %v621 = vunpack.c.l.b16 %v280
    %v622 = vunpack.c.h.b16 %v280
    %v623 = vunpack.c.l.b16 %v281
    %v624 = vunpack.c.h.b16 %v281
    %v625 = vunpack.c.l.b16 %v282
    %v626 = vunpack.c.l.b16 %v283
    %v627 = vunpack.c.h.b16 %v283
    %v628 = vunpack.c.l.b16 %v284
    %v629 = vunpack.c.h.b16 %v284
    %v630 = vunpack.c.l.b16 %v285
    %v631 = vunpack.c.l.b16 %v286
    %v632 = vunpack.c.h.b16 %v286
    %v633 = vunpack.c.l.b16 %v287
    %v634 = vunpack.c.h.b16 %v287
    %v635 = vunpack.c.l.b16 %v288
    %v636 = vunpack.c.l.b16 %v289
    %v637 = vunpack.c.h.b16 %v289
    %v638 = vunpack.c.l.b16 %v290
    %v639 = vunpack.c.h.b16 %v290
    %v640 = vunpack.c.l.b16 %v291
    %v641 = vunpack.c.l.b16 %v292
    %v642 = vunpack.c.h.b16 %v292
    %v643 = vunpack.c.l.b16 %v293
    %v644 = vunpack.c.h.b16 %v293
    %v645 = vunpack.c.l.b16 %v294
    %v646 = vunpack.c.l.b16 %v295
    %v647 = vunpack.c.h.b16 %v295
    %v648 = vunpack.c.l.b16 %v296
    %v649 = vunpack.c.h.b16 %v296
    %v650 = vunpack.c.l.b16 %v297
    %v651 = vunpack.c.l.b16 %v298
    %v652 = vunpack.c.h.b16 %v298
    %v653 = vunpack.c.l.b16 %v299
    %v654 = vunpack.c.h.b16 %v299
    %v655 = vunpack.c.l.b16 %v300
    %v656 = vunpack.c.l.b16 %v301
    %v657 = vunpack.c.h.b16 %v301
    %v658 = vunpack.c.l.b16 %v302
    %v659 = vunpack.c.h.b16 %v302
    %v660 = vunpack.c.l.b16 %v303
    %v661 = vunpack.c.l.b16 %v304
    %v662 = vunpack.c.h.b16 %v304
    %v663 = vunpack.c.l.b16 %v305
    %v664 = vunpack.c.h.b16 %v305
    %v665 = vunpack.c.l.b16 %v306
    %v666 = vunpack.c.l.b16 %v307
    %v667 = vunpack.c.h.b16 %v307
    %v668 = vunpack.c.l.b16 %v308
    %v669 = vunpack.c.h.b16 %v308
    %v670 = vunpack.c.l.b16 %v309
    %v671 = vunpack.c.l.b16 %v310
    %v672 = vunpack.c.h.b16 %v310
    %v673 = vunpack.c.l.b16 %v311
    %v674 = vunpack.c.h.b16 %v311
    %v675 = vunpack.c.l.b16 %v312
    %v676 = vunpack.c.l.b16 %v313
    %v677 = vunpack.c.h.b16 %v313
    %v678 = vunpack.c.l.b16 %v314
    %v679 = vunpack.c.h.b16 %v314
    %v680 = vunpack.c.l.b16 %v315
    %v681 = vunpack.c.l.b16 %v316
    %v682 = vunpack.c.h.b16 %v316
    %v683 = vunpack.c.l.b16 %v317
    %v684 = vunpack.c.h.b16 %v317
    %v685 = vunpack.c.l.b16 %v318
    %v686 = vunpack.c.l.b16 %v319
    %v687 = vunpack.c.h.b16 %v319
    %v688 = vunpack.c.l.b16 %v320
    %v689 = vunpack.c.h.b16 %v320
    %v690 = vunpack.c.l.b16 %v321
    %v691 = vunpack.c.l.b16 %v322
    %v692 = vunpack.c.h.b16 %v322
    %v693 = vunpack.c.l.b16 %v323
    %v694 = vunpack.c.h.b16 %v323
    %v695 = vunpack.c.l.b16 %v324
    %v696 = vunpack.c.l.b16 %v325
    %v697 = vunpack.c.h.b16 %v325
    %v698 = vunpack.c.l.b16 %v326
    %v699 = vunpack.c.h.b16 %v326
    %v700 = vunpack.c.l.b16 %v327
    %v701 = vunpack.c.l.b16 %v328
    %v702 = vunpack.c.h.b16 %v328
    %v703 = vunpack.c.l.b16 %v329
    %v704 = vunpack.c.h.b16 %v329
    %v705 = vunpack.c.l.b16 %v330
    %v706 = vunpack.c.l.b16 %v331
    %v707 = vunpack.c.h.b16 %v331
    %v708 = vunpack.c.l.b16 %v332
    %v709 = vunpack.c.h.b16 %v332
    %v710 = vunpack.c.l.b16 %v333
    %v711 = vunpack.c.l.b16 %v334
    %v712 = vunpack.c.h.b16 %v334
    %v713 = vunpack.c.l.b16 %v335
    %v714 = vunpack.c.h.b16 %v335
    %v715 = vunpack.c.l.b16 %v336
    %v716 = vunpack.c.l.b16 %v337
    %v717 = vunpack.c.h.b16 %v337
    %v718 = vunpack.c.l.b16 %v338
    %v719 = vunpack.c.h.b16 %v338
    %v720 = vunpack.c.l.b16 %v339
    %v721 = vunpack.c.l.b16 %v340
    %v722 = vunpack.c.h.b16 %v340
    %v723 = vunpack.c.l.b16 %v341
    %v724 = vunpack.c.h.b16 %v341
    %v725 = vunpack.c.l.b16 %v342
    %v726 = vunpack.c.l.b16 %v343
    %v727 = vunpack.c.h.b16 %v343
    %v728 = vunpack.c.l.b16 %v344
    %v729 = vunpack.c.h.b16 %v344
    %v730 = vunpack.c.l.b16 %v345
    %v731 = vunpack.c.l.b16 %v346
    %v732 = vunpack.c.h.b16 %v346
    %v733 = vunpack.c.l.b16 %v347
    %v734 = vunpack.c.h.b16 %v347
    %v735 = vunpack.c.l.b16 %v348
    %v736 = vunpack.c.l.b16 %v349
    %v737 = vunpack.c.h.b16 %v349
    %v738 = vunpack.c.l.b16 %v350
    %v739 = vunpack.c.h.b16 %v350
    %v740 = vunpack.c.l.b16 %v351
    %v741 = vunpack.c.l.b16 %v352
    %v742 = vunpack.c.h.b16 %v352
    %v743 = vunpack.c.l.b16 %v353
    %v744 = vunpack.c.h.b16 %v353
    %v745 = vunpack.c.l.b16 %v354
    %v746 = vunpack.c.l.b16 %v355
    %v747 = vunpack.c.h.b16 %v355
    %v748 = vunpack.c.l.b16 %v356
    %v749 = vunpack.c.h.b16 %v356
    %v750 = vunpack.c.l.b16 %v357
    %v751 = vunpack.c.l.b16 %v358
    %v752 = vunpack.c.h.b16 %v358
    %v753 = vunpack.c.l.b16 %v359
    %v754 = vunpack.c.h.b16 %v359
    %v755 = vunpack.c.l.b16 %v360
    %v756 = vunpack.c.l.b16 %v361
    %v757 = vunpack.c.h.b16 %v361
    %v758 = vunpack.c.l.b16 %v362
    %v759 = vunpack.c.h.b16 %v362
    %v760 = vunpack.c.l.b16 %v363
    %v761 = vunpack.c.l.b16 %v364
    %v762 = vunpack.c.h.b16 %v364
    %v763 = vunpack.c.l.b16 %v365
    %v764 = vunpack.c.h.b16 %v365
    %v765 = vunpack.c.l.b16 %v366
    %v766 = vunpack.c.l.b16 %v367
    %v767 = vunpack.c.h.b16 %v367
    %v768 = vunpack.c.l.b16 %v368
    %v769 = vunpack.c.h.b16 %v368
    %v770 = vunpack.c.l.b16 %v369
    %v771 = vunpack.c.l.b16 %v370
    %v772 = vunpack.c.h.b16 %v370
    %v773 = vunpack.c.l.b16 %v371
    %v774 = vunpack.c.h.b16 %v371
    %v775 = vunpack.c.l.b16 %v372
    %v776 = vunpack.c.l.b16 %v373
    %v777 = vunpack.c.h.b16 %v373
    %v778 = vunpack.c.l.b16 %v374
    %v779 = vunpack.c.h.b16 %v374
    %v780 = vunpack.c.l.b16 %v375
    %v781 = vunpack.c.l.b16 %v376
    %v782 = vunpack.c.h.b16 %v376
    %v783 = vunpack.c.l.b16 %v377
    %v784 = vunpack.c.h.b16 %v377
    %v785 = vunpack.c.l.b16 %v378
    %v786 = vunpack.c.l.b16 %v379
    %v787 = vunpack.c.h.b16 %v379
    %v788 = vunpack.c.l.b16 %v380
    %v789 = vunpack.c.h.b16 %v380
    %v790 = vunpack.c.l.b16 %v381
    %v791 = vunpack.c.l.b16 %v382
    %v792 = vunpack.c.h.b16 %v382
    %v793 = vunpack.c.l.b16 %v383
    %v794 = vunpack.c.h.b16 %v383
    %v795 = vunpack.c.l.b16 %v384
    %v796 = vpack.c.b16 %v561, %v556
    %v797 = vpack.c.b16 %v562, %v557
    %v798 = vpack.c.b16 %v563, %v558
    %v799 = vpack.c.b16 %v564, %v559
    %v800 = vpack.c.b16 %v565, %v560
    %v801 = vpack.c.b16 %v571, %v566
    %v802 = vpack.c.b16 %v572, %v567
    %v803 = vpack.c.b16 %v573, %v568
    %v804 = vpack.c.b16 %v574, %v569
    %v805 = vpack.c.b16 %v575, %v570
    %v806 = vpack.c.b16 %v581, %v576
    %v807 = vpack.c.b16 %v582, %v577
    %v808 = vpack.c.b16 %v583, %v578
    %v809 = vpack.c.b16 %v584, %v579
    %v810 = vpack.c.b16 %v585, %v580
    %v811 = vpack.c.b16 %v591, %v586
    %v812 = vpack.c.b16 %v592, %v587
    %v813 = vpack.c.b16 %v593, %v588
    %v814 = vpack.c.b16 %v594, %v589
    %v815 = vpack.c.b16 %v595, %v590
    %v816 = vpack.c.b16 %v601, %v596
    %v817 = vpack.c.b16 %v602, %v597
    %v818 = vpack.c.b16 %v603, %v598
    %v819 = vpack.c.b16 %v604, %v599
    %v820 = vpack.c.b16 %v605, %v600
    %v821 = vpack.c.b16 %v611, %v606
    %v822 = vpack.c.b16 %v612, %v607
    %v823 = vpack.c.b16 %v613, %v608
    %v824 = vpack.c.b16 %v614, %v609
    %v825 = vpack.c.b16 %v615, %v610
    %v826 = vpack.c.b16 %v621, %v616
    %v827 = vpack.c.b16 %v622, %v617
    %v828 = vpack.c.b16 %v623, %v618
    %v829 = vpack.c.b16 %v624, %v619
    %v830 = vpack.c.b16 %v625, %v620
    %v831 = vpack.c.b16 %v631, %v626
    %v832 = vpack.c.b16 %v632, %v627
    %v833 = vpack.c.b16 %v633, %v628
    %v834 = vpack.c.b16 %v634, %v629
    %v835 = vpack.c.b16 %v635, %v630
    %v836 = vpack.c.b16 %v641, %v636
    %v837 = vpack.c.b16 %v642, %v637
    %v838 = vpack.c.b16 %v643, %v638
    %v839 = vpack.c.b16 %v644, %v639
    %v840 = vpack.c.b16 %v645, %v640
    %v841 = vpack.c.b16 %v651, %v646
    %v842 = vpack.c.b16 %v652, %v647
    %v843 = vpack.c.b16 %v653, %v648
    %v844 = vpack.c.b16 %v654, %v649
    %v845 = vpack.c.b16 %v655, %v650
    %v846 = vpack.c.b16 %v661, %v656
    %v847 = vpack.c.b16 %v662, %v657
    %v848 = vpack.c.b16 %v663, %v658
    %v849 = vpack.c.b16 %v664, %v659
    %v850 = vpack.c.b16 %v665, %v660
    %v851 = vpack.c.b16 %v671, %v666
    %v852 = vpack.c.b16 %v672, %v667
    %v853 = vpack.c.b16 %v673, %v668
    %v854 = vpack.c.b16 %v674, %v669
    %v855 = vpack.c.b16 %v675, %v670
    %v856 = vpack.c.b16 %v681, %v676
    %v857 = vpack.c.b16 %v682, %v677
    %v858 = vpack.c.b16 %v683, %v678
    %v859 = vpack.c.b16 %v684, %v679
    %v860 = vpack.c.b16 %v685, %v680
    %v861 = vpack.c.b16 %v691, %v686
    %v862 = vpack.c.b16 %v692, %v687
    %v863 = vpack.c.b16 %v693, %v688
    %v864 = vpack.c.b16 %v694, %v689
    %v865 = vpack.c.b16 %v695, %v690
    %v866 = vpack.c.b16 %v701, %v696
    %v867 = vpack.c.b16 %v702, %v697
    %v868 = vpack.c.b16 %v703, %v698
    %v869 = vpack.c.b16 %v704, %v699
    %v870 = vpack.c.b16 %v705, %v700
    %v871 = vpack.c.b16 %v711, %v706
    %v872 = vpack.c.b16 %v712, %v707
    %v873 = vpack.c.b16 %v713, %v708
    %v874 = vpack.c.b16 %v714, %v709
    %v875 = vpack.c.b16 %v715, %v710
    %v876 = vpack.c.b16 %v721, %v716
    %v877 = vpack.c.b16 %v722, %v717
    %v878 = vpack.c.b16 %v723, %v718
    %v879 = vpack.c.b16 %v724, %v719
    %v880 = vpack.c.b16 %v725, %v720
    %v881 = vpack.c.b16 %v731, %v726
    %v882 = vpack.c.b16 %v732, %v727
    %v883 = vpack.c.b16 %v733, %v728
    %v884 = vpack.c.b16 %v734, %v729
    %v885 = vpack.c.b16 %v735, %v730
    %v886 = vpack.c.b16 %v741, %v736
    %v887 = vpack.c.b16 %v742, %v737
    %v888 = vpack.c.b16 %v743, %v738
    %v889 = vpack.c.b16 %v744, %v739
    %v890 = vpack.c.b16 %v745, %v740
    %v891 = vpack.c.b16 %v751, %v746
    %v892 = vpack.c.b16 %v752, %v747
    %v893 = vpack.c.b16 %v753, %v748
    %v894 = vpack.c.b16 %v754, %v749
    %v895 = vpack.c.b16 %v755, %v750
    %v896 = vpack.c.b16 %v761, %v756
    %v897 = vpack.c.b16 %v762, %v757
    %v898 = vpack.c.b16 %v763, %v758
    %v899 = vpack.c.b16 %v764, %v759
    %v900 = vpack.c.b16 %v765, %v760
    %v901 = vpack.c.b16 %v771, %v766
    %v902 = vpack.c.b16 %v772, %v767
    %v903 = vpack.c.b16 %v773, %v768
    %v904 = vpack.c.b16 %v774, %v769
    %v905 = vpack.c.b16 %v775, %v770
    %v906 = vpack.c.b16 %v781, %v776
    %v907 = vpack.c.b16 %v782, %v777
    %v908 = vpack.c.b16 %v783, %v778
    %v909 = vpack.c.b16 %v784, %v779
    %v910 = vpack.c.b16 %v785, %v780
    %v911 = vpack.c.b16 %v791, %v786
    %v912 = vpack.c.b16 %v792, %v787
    %v913 = vpack.c.b16 %v793, %v788
    %v914 = vpack.c.b16 %v794, %v789
    %v915 = vpack.c.b16 %v795, %v790
    %1036 = vmatprep.subr.bf16.mxu0 %v797
    %1037 = vmatpush1.bf16.msra.mxu0 %v796
    %1038 = vmatprep.subr.bf16.mxu0 %v802
    %1039 = vmatpush1.bf16.msra.mxu0 %v801
    %1040 = vmatprep.subr.bf16.mxu0 %v807
    %1041 = vmatpush1.bf16.msra.mxu0 %v806
    %1042 = vmatprep.subr.bf16.mxu0 %v812
    %1043 = vmatpush1.bf16.msra.mxu0 %v811
    %1044 = vmatprep.subr.bf16.mxu0 %v817
    %1045 = vmatpush1.bf16.msra.mxu0 %v816
    %1046 = vmatprep.subr.bf16.mxu0 %v822
    %1047 = vmatpush1.bf16.msra.mxu0 %v821
    %1048 = vmatprep.subr.bf16.mxu0 %v827
    %1049 = vmatpush1.bf16.msra.mxu0 %v826
    %1050 = vmatprep.subr.bf16.mxu0 %v832
    %1051 = vmatpush1.bf16.msra.mxu0 %v831
    %1052 = vmatprep.subr.bf16.mxu0 %v837
    %1053 = vmatpush1.bf16.msra.mxu0 %v836
    %1054 = vmatprep.subr.bf16.mxu0 %v842
    %1055 = vmatpush1.bf16.msra.mxu0 %v841
    %1056 = vmatprep.subr.bf16.mxu0 %v847
    %1057 = vmatpush1.bf16.msra.mxu0 %v846
    %1058 = vmatprep.subr.bf16.mxu0 %v852
    %1059 = vmatpush1.bf16.msra.mxu0 %v851
    %1060 = vmatprep.subr.bf16.mxu0 %v857
    %1061 = vmatpush1.bf16.msra.mxu0 %v856
    %1062 = vmatprep.subr.bf16.mxu0 %v862
    %1063 = vmatpush1.bf16.msra.mxu0 %v861
    %1064 = vmatprep.subr.bf16.mxu0 %v867
    %1065 = vmatpush1.bf16.msra.mxu0 %v866
    %1066 = vmatprep.subr.bf16.mxu0 %v872
    %1067 = vmatpush1.bf16.msra.mxu0 %v871
    %1068 = vmatprep.mubr.bf16.mxu0 %v239
    %1069 = vmatmul.mubr.bf16.gmra.mrb[0].mxu0 %v238
    %v1070 = vpop.f32.mrb[0].mxu0
    %v1071 = vadd.f32 %v390, %v1070
    %v1072 = vpop.f32.mrb[0].mxu0
    %v1073 = vadd.f32 %v394, %v1072
    %v1074 = vpop.f32.mrb[0].mxu0
    %v1075 = vpop.f32.mrb[0].mxu0
    %1076 = vdwg.mxu0
    %1077 = vmatprep.subr.bf16.mxu0 %v877
    %1078 = vmatpush1.bf16.msra.mxu0 %v876
    %1079 = vmatprep.subr.bf16.mxu0 %v882
    %1080 = vmatpush1.bf16.msra.mxu0 %v881
    %1081 = vmatprep.subr.bf16.mxu0 %v887
    %1082 = vmatpush1.bf16.msra.mxu0 %v886
    %1083 = vmatprep.subr.bf16.mxu0 %v892
    %1084 = vmatpush1.bf16.msra.mxu0 %v891
    %1085 = vmatprep.subr.bf16.mxu0 %v897
    %1086 = vmatpush1.bf16.msra.mxu0 %v896
    %1087 = vmatprep.subr.bf16.mxu0 %v902
    %1088 = vmatpush1.bf16.msra.mxu0 %v901
    %1089 = vmatprep.subr.bf16.mxu0 %v907
    %1090 = vmatpush1.bf16.msra.mxu0 %v906
    %1091 = vmatprep.subr.bf16.mxu0 %v912
    %1092 = vmatpush1.bf16.msra.mxu0 %v911
    %1093 = vmatprep.subr.bf16.mxu0 0
    %1094 = vmatpush1.bf16.msra.mxu0 0
    %1095 = vmatprep.subr.bf16.mxu0 0
    %1096 = vmatpush1.bf16.msra.mxu0 0
    %1097 = vmatprep.subr.bf16.mxu0 0
    %1098 = vmatpush1.bf16.msra.mxu0 0
    %1099 = vmatprep.subr.bf16.mxu0 0
    %1100 = vmatpush1.bf16.msra.mxu0 0
    %1101 = vmatprep.subr.bf16.mxu0 0
    %1102 = vmatpush1.bf16.msra.mxu0 0
    %1103 = vmatprep.subr.bf16.mxu0 0
    %1104 = vmatpush1.bf16.msra.mxu0 0
    %1105 = vmatprep.subr.bf16.mxu0 0
    %1106 = vmatpush1.bf16.msra.mxu0 0
    %1107 = vmatprep.subr.bf16.mxu0 0
    %1108 = vmatpush1.bf16.msra.mxu0 0
    %1109 = vmatprep.mubr.bf16.mxu0 0
    %1110 = vmatmul.mubr.bf16.gmra.mrb[0].mxu0 %v240
    %v1111 = vpop.f32.mrb[0].mxu0
    %v1112 = vadd.f32 %v1071, %v1111
    %v1113 = vpop.f32.mrb[0].mxu0
    %v1114 = vadd.f32 %v1073, %v1113
    %v1115 = vpop.f32.mrb[0].mxu0
    %v1116 = vpop.f32.mrb[0].mxu0
    %1117 = vdwg.mxu0
    %1118 = vmatprep.subr.bf16.mxu0 %v799
    %1119 = vmatpush1.bf16.msra.mxu0 %v798
    %1120 = vmatprep.subr.bf16.mxu0 %v804
    %1121 = vmatpush1.bf16.msra.mxu0 %v803
    %1122 = vmatprep.subr.bf16.mxu0 %v809
    %1123 = vmatpush1.bf16.msra.mxu0 %v808
    %1124 = vmatprep.subr.bf16.mxu0 %v814
    %1125 = vmatpush1.bf16.msra.mxu0 %v813
    %1126 = vmatprep.subr.bf16.mxu0 %v819
    %1127 = vmatpush1.bf16.msra.mxu0 %v818
    %1128 = vmatprep.subr.bf16.mxu0 %v824
    %1129 = vmatpush1.bf16.msra.mxu0 %v823
    %1130 = vmatprep.subr.bf16.mxu0 %v829
    %1131 = vmatpush1.bf16.msra.mxu0 %v828
    %1132 = vmatprep.subr.bf16.mxu0 %v834
    %1133 = vmatpush1.bf16.msra.mxu0 %v833
    %1134 = vmatprep.subr.bf16.mxu0 %v839
    %1135 = vmatpush1.bf16.msra.mxu0 %v838
    %1136 = vmatprep.subr.bf16.mxu0 %v844
    %1137 = vmatpush1.bf16.msra.mxu0 %v843
    %1138 = vmatprep.subr.bf16.mxu0 %v849
    %1139 = vmatpush1.bf16.msra.mxu0 %v848
    %1140 = vmatprep.subr.bf16.mxu0 %v854
    %1141 = vmatpush1.bf16.msra.mxu0 %v853
    %1142 = vmatprep.subr.bf16.mxu0 %v859
    %1143 = vmatpush1.bf16.msra.mxu0 %v858
    %1144 = vmatprep.subr.bf16.mxu0 %v864
    %1145 = vmatpush1.bf16.msra.mxu0 %v863
    %1146 = vmatprep.subr.bf16.mxu0 %v869
    %1147 = vmatpush1.bf16.msra.mxu0 %v868
    %1148 = vmatprep.subr.bf16.mxu0 %v874
    %1149 = vmatpush1.bf16.msra.mxu0 %v873
    %1150 = vmatprep.mubr.bf16.mxu0 %v239
    %1151 = vmatmul.mubr.bf16.gmra.mrb[0].mxu0 %v238
    %v1152 = vpop.f32.mrb[0].mxu0
    %v1153 = vadd.f32 %v398, %v1152
    %v1154 = vpop.f32.mrb[0].mxu0
    %v1155 = vadd.f32 %v402, %v1154
    %v1156 = vpop.f32.mrb[0].mxu0
    %v1157 = vpop.f32.mrb[0].mxu0
    %1158 = vdwg.mxu0
    %1159 = vmatprep.subr.bf16.mxu0 %v879
    %1160 = vmatpush1.bf16.msra.mxu0 %v878
    %1161 = vmatprep.subr.bf16.mxu0 %v884
    %1162 = vmatpush1.bf16.msra.mxu0 %v883
    %1163 = vmatprep.subr.bf16.mxu0 %v889
    %1164 = vmatpush1.bf16.msra.mxu0 %v888
    %1165 = vmatprep.subr.bf16.mxu0 %v894
    %1166 = vmatpush1.bf16.msra.mxu0 %v893
    %1167 = vmatprep.subr.bf16.mxu0 %v899
    %1168 = vmatpush1.bf16.msra.mxu0 %v898
    %1169 = vmatprep.subr.bf16.mxu0 %v904
    %1170 = vmatpush1.bf16.msra.mxu0 %v903
    %1171 = vmatprep.subr.bf16.mxu0 %v909
    %1172 = vmatpush1.bf16.msra.mxu0 %v908
    %1173 = vmatprep.subr.bf16.mxu0 %v914
    %1174 = vmatpush1.bf16.msra.mxu0 %v913
    %1175 = vmatprep.subr.bf16.mxu0 0
    %1176 = vmatpush1.bf16.msra.mxu0 0
    %1177 = vmatprep.subr.bf16.mxu0 0
    %1178 = vmatpush1.bf16.msra.mxu0 0
    %1179 = vmatprep.subr.bf16.mxu0 0
    %1180 = vmatpush1.bf16.msra.mxu0 0
    %1181 = vmatprep.subr.bf16.mxu0 0
    %1182 = vmatpush1.bf16.msra.mxu0 0
    %1183 = vmatprep.subr.bf16.mxu0 0
    %1184 = vmatpush1.bf16.msra.mxu0 0
    %1185 = vmatprep.subr.bf16.mxu0 0
    %1186 = vmatpush1.bf16.msra.mxu0 0
    %1187 = vmatprep.subr.bf16.mxu0 0
    %1188 = vmatpush1.bf16.msra.mxu0 0
    %1189 = vmatprep.subr.bf16.mxu0 0
    %1190 = vmatpush1.bf16.msra.mxu0 0
    %1191 = vmatprep.mubr.bf16.mxu0 0
    %1192 = vmatmul.mubr.bf16.gmra.mrb[0].mxu0 %v240
    %v1193 = vpop.f32.mrb[0].mxu0
    %v1194 = vadd.f32 %v1153, %v1193
    %v1195 = vpop.f32.mrb[0].mxu0
    %v1196 = vadd.f32 %v1155, %v1195
    %v1197 = vpop.f32.mrb[0].mxu0
    %v1198 = vpop.f32.mrb[0].mxu0
    %1199 = vdwg.mxu0
    %1200 = vmatprep.subr.bf16.mxu0 0
    %1201 = vmatpush1.bf16.msra.mxu0 %v800
    %1202 = vmatprep.subr.bf16.mxu0 0
    %1203 = vmatpush1.bf16.msra.mxu0 %v805
    %1204 = vmatprep.subr.bf16.mxu0 0
    %1205 = vmatpush1.bf16.msra.mxu0 %v810
    %1206 = vmatprep.subr.bf16.mxu0 0
    %1207 = vmatpush1.bf16.msra.mxu0 %v815
    %1208 = vmatprep.subr.bf16.mxu0 0
    %1209 = vmatpush1.bf16.msra.mxu0 %v820
    %1210 = vmatprep.subr.bf16.mxu0 0
    %1211 = vmatpush1.bf16.msra.mxu0 %v825
    %1212 = vmatprep.subr.bf16.mxu0 0
    %1213 = vmatpush1.bf16.msra.mxu0 %v830
    %1214 = vmatprep.subr.bf16.mxu0 0
    %1215 = vmatpush1.bf16.msra.mxu0 %v835
    %1216 = vmatprep.subr.bf16.mxu0 0
    %1217 = vmatpush1.bf16.msra.mxu0 %v840
    %1218 = vmatprep.subr.bf16.mxu0 0
    %1219 = vmatpush1.bf16.msra.mxu0 %v845
    %1220 = vmatprep.subr.bf16.mxu0 0
    %1221 = vmatpush1.bf16.msra.mxu0 %v850
    %1222 = vmatprep.subr.bf16.mxu0 0
    %1223 = vmatpush1.bf16.msra.mxu0 %v855
    %1224 = vmatprep.subr.bf16.mxu0 0
    %1225 = vmatpush1.bf16.msra.mxu0 %v860
    %1226 = vmatprep.subr.bf16.mxu0 0
    %1227 = vmatpush1.bf16.msra.mxu0 %v865
    %1228 = vmatprep.subr.bf16.mxu0 0
    %1229 = vmatpush1.bf16.msra.mxu0 %v870
    %1230 = vmatprep.subr.bf16.mxu0 0
    %1231 = vmatpush1.bf16.msra.mxu0 %v875
    %1232 = vmatprep.mubr.bf16.mxu0 %v239
    %1233 = vmatmul.mubr.bf16.gmra.mrb[0].mxu0 %v238
    %v1234 = vpop.f32.mrb[0].mxu0
    %v1235 = vadd.f32 %v406, %v1234
    %v1236 = vpop.f32.mrb[0].mxu0
    %v1237 = vpop.f32.mrb[0].mxu0
    %v1238 = vpop.f32.mrb[0].mxu0
    %1239 = vdwg.mxu0
    %1240 = vmatprep.subr.bf16.mxu0 0
    %1241 = vmatpush1.bf16.msra.mxu0 %v880
    %1242 = vmatprep.subr.bf16.mxu0 0
    %1243 = vmatpush1.bf16.msra.mxu0 %v885
    %1244 = vmatprep.subr.bf16.mxu0 0
    %1245 = vmatpush1.bf16.msra.mxu0 %v890
    %1246 = vmatprep.subr.bf16.mxu0 0
    %1247 = vmatpush1.bf16.msra.mxu0 %v895
    %1248 = vmatprep.subr.bf16.mxu0 0
    %1249 = vmatpush1.bf16.msra.mxu0 %v900
    %1250 = vmatprep.subr.bf16.mxu0 0
    %1251 = vmatpush1.bf16.msra.mxu0 %v905
    %1252 = vmatprep.subr.bf16.mxu0 0
    %1253 = vmatpush1.bf16.msra.mxu0 %v910
    %1254 = vmatprep.subr.bf16.mxu0 0
    %1255 = vmatpush1.bf16.msra.mxu0 %v915
    %1256 = vmatprep.subr.bf16.mxu0 0
    %1257 = vmatpush1.bf16.msra.mxu0 0
    %1258 = vmatprep.subr.bf16.mxu0 0
    %1259 = vmatpush1.bf16.msra.mxu0 0
    %1260 = vmatprep.subr.bf16.mxu0 0
    %1261 = vmatpush1.bf16.msra.mxu0 0
    %1262 = vmatprep.subr.bf16.mxu0 0
    %1263 = vmatpush1.bf16.msra.mxu0 0
    %1264 = vmatprep.subr.bf16.mxu0 0
    %1265 = vmatpush1.bf16.msra.mxu0 0
    %1266 = vmatprep.subr.bf16.mxu0 0
    %1267 = vmatpush1.bf16.msra.mxu0 0
    %1268 = vmatprep.subr.bf16.mxu0 0
    %1269 = vmatpush1.bf16.msra.mxu0 0
    %1270 = vmatprep.subr.bf16.mxu0 0
    %1271 = vmatpush1.bf16.msra.mxu0 0
    %1272 = vmatprep.mubr.bf16.mxu0 0
    %1273 = vmatmul.mubr.bf16.gmra.mrb[0].mxu0 %v240
    %v1274 = vpop.f32.mrb[0].mxu0
    %v1275 = vadd.f32 %v1235, %v1274
    %v1276 = vpop.f32.mrb[0].mxu0
    %v1277 = vpop.f32.mrb[0].mxu0
    %v1278 = vpop.f32.mrb[0].mxu0
    %1279 = vdwg.mxu0
    %v1280 = vmax.f32 %v1112, 0.0
    %v1281 = vmax.f32 %v1114, 0.0
    %v1282 = vmax.f32 %v1194, 0.0
    %v1283 = vmax.f32 %v1196, 0.0
    %v1284 = vmax.f32 %v1275, 0.0
    %v1285 = vpack.c.bf16 %v1280, %v1280
    %v1286 = vpack.c.bf16 %v1281, %v1281
    %v1287 = vpack.c.bf16 %v1282, %v1282
    %v1288 = vpack.c.bf16 %v1283, %v1283
    %v1289 = vpack.c.bf16 %v1284, %v1284
    %v1290 = vld [vmem:[#allocation8] sm:$0xf]
    %v1291 = vld [vmem:[#allocation8 + $0x4] sm:$0xf]
    %v1292 = vld [vmem:[#allocation8 + $0x8] sm:$0xf]
    %v1293 = vld [vmem:[#allocation8 + $0xc] sm:$0xf]
    %v1294 = vld [vmem:[#allocation8 + $0x10] sm:$0xf]
    %v1295 = vld [vmem:[#allocation8 + $0x14] sm:$0xf]
    %v1296 = vld [vmem:[#allocation8 + $0x18] sm:$0xf]
    %v1297 = vld [vmem:[#allocation8 + $0x1c] sm:$0xf]
    %v1298 = vld [vmem:[#allocation8 + $0x20] sm:$0xf]
    %v1299 = vld [vmem:[#allocation8 + $0x24] sm:$0xf]
    %v1300 = vld [vmem:[#allocation8 + $0x28] sm:$0xf]
    %v1301 = vld [vmem:[#allocation8 + $0x2c] sm:$0xf]
    %v1302 = vld [vmem:[#allocation8 + $0x30] sm:$0xf]
    %v1303 = vld [vmem:[#allocation8 + $0x34] sm:$0xf]
    %v1304 = vld [vmem:[#allocation8 + $0x38] sm:$0xf]
    %v1305 = vld [vmem:[#allocation8 + $0x3c] sm:$0xf]
    %v1306 = vld [vmem:[#allocation8 + $0x40] sm:$0xf]
    %v1307 = vld [vmem:[#allocation8 + $0x44] sm:$0xf]
    %v1308 = vld [vmem:[#allocation8 + $0x48] sm:$0xf]
    %v1309 = vld [vmem:[#allocation8 + $0x4c] sm:$0xf]
    %v1310 = vld [vmem:[#allocation8 + $0x50] sm:$0xf]
    %v1311 = vld [vmem:[#allocation8 + $0x54] sm:$0xf]
    %v1312 = vld [vmem:[#allocation8 + $0x58] sm:$0xf]
    %v1313 = vld [vmem:[#allocation8 + $0x5c] sm:$0xf]
    %v1314 = vld [vmem:[#allocation8 + $0x60] sm:$0xf]
    %v1315 = vld [vmem:[#allocation8 + $0x64] sm:$0xf]
    %v1316 = vld [vmem:[#allocation8 + $0x68] sm:$0xf]
    %v1317 = vld [vmem:[#allocation8 + $0x6c] sm:$0xf]
    %v1318 = vld [vmem:[#allocation8 + $0x70] sm:$0xf]
    %v1319 = vld [vmem:[#allocation8 + $0x74] sm:$0xf]
    %v1320 = vld [vmem:[#allocation8 + $0x78] sm:$0xf]
    %v1321 = vld [vmem:[#allocation8 + $0x7c] sm:$0xf]
    %v1322 = vld [vmem:[#allocation8 + $0x80] sm:$0xf]
    %v1323 = vld [vmem:[#allocation8 + $0x84] sm:$0xf]
    %v1324 = vld [vmem:[#allocation8 + $0x88] sm:$0xf]
    %v1325 = vld [vmem:[#allocation8 + $0x8c] sm:$0xf]
    %v1326 = vld [vmem:[#allocation8 + $0x90] sm:$0xf]
    %v1327 = vld [vmem:[#allocation8 + $0x94] sm:$0xf]
    %v1328 = vld [vmem:[#allocation8 + $0x98] sm:$0xf]
    %v1329 = vld [vmem:[#allocation8 + $0x9c] sm:$0xf]
    %v1330 = vld [vmem:[#allocation8 + $0xa0] sm:$0xf]
    %v1331 = vld [vmem:[#allocation8 + $0xa4] sm:$0xf]
    %v1332 = vld [vmem:[#allocation8 + $0xa8] sm:$0xf]
    %v1333 = vld [vmem:[#allocation8 + $0xac] sm:$0xf]
    %v1334 = vld [vmem:[#allocation8 + $0xb0] sm:$0xf]
    %v1335 = vld [vmem:[#allocation8 + $0xb4] sm:$0xf]
    %v1336 = vld [vmem:[#allocation8 + $0xb8] sm:$0xf]
    %v1337 = vld [vmem:[#allocation8 + $0xbc] sm:$0xf]
    %v1338 = vld [vmem:[#allocation8 + $0xc0] sm:$0xf]
    %v1339 = vld [vmem:[#allocation8 + $0xc4] sm:$0xf]
    %v1340 = vld [vmem:[#allocation8 + $0xc8] sm:$0xf]
    %v1341 = vld [vmem:[#allocation8 + $0xcc] sm:$0xf]
    %v1342 = vld [vmem:[#allocation8 + $0xd0] sm:$0xf]
    %v1343 = vld [vmem:[#allocation8 + $0xd4] sm:$0xf]
    %v1344 = vld [vmem:[#allocation8 + $0xd8] sm:$0xf]
    %v1345 = vld [vmem:[#allocation8 + $0xdc] sm:$0xf]
    %v1346 = vld [vmem:[#allocation8 + $0xe0] sm:$0xf]
    %v1347 = vld [vmem:[#allocation8 + $0xe4] sm:$0xf]
    %v1348 = vld [vmem:[#allocation8 + $0xe8] sm:$0xf]
    %v1349 = vld [vmem:[#allocation8 + $0xec] sm:$0xf]
    %v1350 = vld [vmem:[#allocation8 + $0xf0] sm:$0xf]
    %v1351 = vld [vmem:[#allocation8 + $0xf4] sm:$0xf]
    %v1352 = vld [vmem:[#allocation8 + $0xf8] sm:$0xf]
    %v1353 = vld [vmem:[#allocation8 + $0xfc] sm:$0xf]
    %v1354 = vld [vmem:[#allocation8 + $0x100] sm:$0xf]
    %v1355 = vld [vmem:[#allocation8 + $0x104] sm:$0xf]
    %v1356 = vld [vmem:[#allocation8 + $0x108] sm:$0xf]
    %v1357 = vld [vmem:[#allocation8 + $0x10c] sm:$0xf]
    %v1358 = vld [vmem:[#allocation8 + $0x110] sm:$0xf]
    %v1359 = vld [vmem:[#allocation8 + $0x114] sm:$0xf]
    %v1360 = vld [vmem:[#allocation8 + $0x118] sm:$0xf]
    %v1361 = vld [vmem:[#allocation8 + $0x11c] sm:$0xf]
    %v1362 = vld [vmem:[#allocation8 + $0x120] sm:$0xf]
    %v1363 = vld [vmem:[#allocation8 + $0x124] sm:$0xf]
    %v1364 = vld [vmem:[#allocation8 + $0x128] sm:$0xf]
    %v1365 = vld [vmem:[#allocation8 + $0x12c] sm:$0xf]
    %v1366 = vld [vmem:[#allocation8 + $0x130] sm:$0xf]
    %v1367 = vld [vmem:[#allocation8 + $0x134] sm:$0xf]
    %v1368 = vld [vmem:[#allocation8 + $0x138] sm:$0xf]
    %v1369 = vld [vmem:[#allocation8 + $0x13c] sm:$0xf]
    %v1370 = vld [vmem:[%s6] sm:$0x1]
    %v1372 = vlaneseq
    %v1373 = vshrl.u32 %v1372, 7
    %v1374 = vsub.s32 0, %v1373
    %v1375 = vrot.slane %v1370, %v1374
    %v1457 = vunpack.c.l.b16 %v1290
    %v1458 = vunpack.c.l.b16 %v1291
    %v1459 = vunpack.c.l.b16 %v1292
    %v1460 = vunpack.c.l.b16 %v1293
    %v1461 = vunpack.c.l.b16 %v1294
    %v1462 = vunpack.c.l.b16 %v1295
    %v1463 = vunpack.c.l.b16 %v1296
    %v1464 = vunpack.c.l.b16 %v1297
    %v1465 = vunpack.c.l.b16 %v1298
    %v1466 = vunpack.c.l.b16 %v1299
    %v1467 = vunpack.c.l.b16 %v1300
    %v1468 = vunpack.c.l.b16 %v1301
    %v1469 = vunpack.c.l.b16 %v1302
    %v1470 = vunpack.c.l.b16 %v1303
    %v1471 = vunpack.c.l.b16 %v1304
    %v1472 = vunpack.c.l.b16 %v1305
    %v1473 = vunpack.c.l.b16 %v1306
    %v1474 = vunpack.c.l.b16 %v1307
    %v1475 = vunpack.c.l.b16 %v1308
    %v1476 = vunpack.c.l.b16 %v1309
    %v1477 = vunpack.c.l.b16 %v1310
    %v1478 = vunpack.c.l.b16 %v1311
    %v1479 = vunpack.c.l.b16 %v1312
    %v1480 = vunpack.c.l.b16 %v1313
    %v1481 = vunpack.c.l.b16 %v1314
    %v1482 = vunpack.c.l.b16 %v1315
    %v1483 = vunpack.c.l.b16 %v1316
    %v1484 = vunpack.c.l.b16 %v1317
    %v1485 = vunpack.c.l.b16 %v1318
    %v1486 = vunpack.c.l.b16 %v1319
    %v1487 = vunpack.c.l.b16 %v1320
    %v1488 = vunpack.c.l.b16 %v1321
    %v1489 = vunpack.c.l.b16 %v1322
    %v1490 = vunpack.c.l.b16 %v1323
    %v1491 = vunpack.c.l.b16 %v1324
    %v1492 = vunpack.c.l.b16 %v1325
    %v1493 = vunpack.c.l.b16 %v1326
    %v1494 = vunpack.c.l.b16 %v1327
    %v1495 = vunpack.c.l.b16 %v1328
    %v1496 = vunpack.c.l.b16 %v1329
    %v1497 = vunpack.c.l.b16 %v1330
    %v1498 = vunpack.c.l.b16 %v1331
    %v1499 = vunpack.c.l.b16 %v1332
    %v1500 = vunpack.c.l.b16 %v1333
    %v1501 = vunpack.c.l.b16 %v1334
    %v1502 = vunpack.c.l.b16 %v1335
    %v1503 = vunpack.c.l.b16 %v1336
    %v1504 = vunpack.c.l.b16 %v1337
    %v1505 = vunpack.c.l.b16 %v1338
    %v1506 = vunpack.c.l.b16 %v1339
    %v1507 = vunpack.c.l.b16 %v1340
    %v1508 = vunpack.c.l.b16 %v1341
    %v1509 = vunpack.c.l.b16 %v1342
    %v1510 = vunpack.c.l.b16 %v1343
    %v1511 = vunpack.c.l.b16 %v1344
    %v1512 = vunpack.c.l.b16 %v1345
    %v1513 = vunpack.c.l.b16 %v1346
    %v1514 = vunpack.c.l.b16 %v1347
    %v1515 = vunpack.c.l.b16 %v1348
    %v1516 = vunpack.c.l.b16 %v1349
    %v1517 = vunpack.c.l.b16 %v1350
    %v1518 = vunpack.c.l.b16 %v1351
    %v1519 = vunpack.c.l.b16 %v1352
    %v1520 = vunpack.c.l.b16 %v1353
    %v1521 = vunpack.c.l.b16 %v1354
    %v1522 = vunpack.c.l.b16 %v1355
    %v1523 = vunpack.c.l.b16 %v1356
    %v1524 = vunpack.c.l.b16 %v1357
    %v1525 = vunpack.c.l.b16 %v1358
    %v1526 = vunpack.c.l.b16 %v1359
    %v1527 = vunpack.c.l.b16 %v1360
    %v1528 = vunpack.c.l.b16 %v1361
    %v1529 = vunpack.c.l.b16 %v1362
    %v1530 = vunpack.c.l.b16 %v1363
    %v1531 = vunpack.c.l.b16 %v1364
    %v1532 = vunpack.c.l.b16 %v1365
    %v1533 = vunpack.c.l.b16 %v1366
    %v1534 = vunpack.c.l.b16 %v1367
    %v1535 = vunpack.c.l.b16 %v1368
    %v1536 = vunpack.c.l.b16 %v1369
    %v1537 = vpack.c.b16 %v1458, %v1457
    %v1538 = vpack.c.b16 %v1460, %v1459
    %v1539 = vpack.c.b16 %v1462, %v1461
    %v1540 = vpack.c.b16 %v1464, %v1463
    %v1541 = vpack.c.b16 %v1466, %v1465
    %v1542 = vpack.c.b16 %v1468, %v1467
    %v1543 = vpack.c.b16 %v1470, %v1469
    %v1544 = vpack.c.b16 %v1472, %v1471
    %v1545 = vpack.c.b16 %v1474, %v1473
    %v1546 = vpack.c.b16 %v1476, %v1475
    %v1547 = vpack.c.b16 %v1478, %v1477
    %v1548 = vpack.c.b16 %v1480, %v1479
    %v1549 = vpack.c.b16 %v1482, %v1481
    %v1550 = vpack.c.b16 %v1484, %v1483
    %v1551 = vpack.c.b16 %v1486, %v1485
    %v1552 = vpack.c.b16 %v1488, %v1487
    %v1553 = vpack.c.b16 %v1490, %v1489
    %v1554 = vpack.c.b16 %v1492, %v1491
    %v1555 = vpack.c.b16 %v1494, %v1493
    %v1556 = vpack.c.b16 %v1496, %v1495
    %v1557 = vpack.c.b16 %v1498, %v1497
    %v1558 = vpack.c.b16 %v1500, %v1499
    %v1559 = vpack.c.b16 %v1502, %v1501
    %v1560 = vpack.c.b16 %v1504, %v1503
    %v1561 = vpack.c.b16 %v1506, %v1505
    %v1562 = vpack.c.b16 %v1508, %v1507
    %v1563 = vpack.c.b16 %v1510, %v1509
    %v1564 = vpack.c.b16 %v1512, %v1511
    %v1565 = vpack.c.b16 %v1514, %v1513
    %v1566 = vpack.c.b16 %v1516, %v1515
    %v1567 = vpack.c.b16 %v1518, %v1517
    %v1568 = vpack.c.b16 %v1520, %v1519
    %v1569 = vpack.c.b16 %v1522, %v1521
    %v1570 = vpack.c.b16 %v1524, %v1523
    %v1571 = vpack.c.b16 %v1526, %v1525
    %v1572 = vpack.c.b16 %v1528, %v1527
    %v1573 = vpack.c.b16 %v1530, %v1529
    %v1574 = vpack.c.b16 %v1532, %v1531
    %v1575 = vpack.c.b16 %v1534, %v1533
    %v1576 = vpack.c.b16 %v1536, %v1535
    %1617 = vmatprep.subr.bf16.mxu0 0
    %1618 = vmatpush1.bf16.msra.mxu0 %v1537
    %1619 = vmatprep.subr.bf16.mxu0 0
    %1620 = vmatpush1.bf16.msra.mxu0 %v1538
    %1621 = vmatprep.subr.bf16.mxu0 0
    %1622 = vmatpush1.bf16.msra.mxu0 %v1539
    %1623 = vmatprep.subr.bf16.mxu0 0
    %1624 = vmatpush1.bf16.msra.mxu0 %v1540
    %1625 = vmatprep.subr.bf16.mxu0 0
    %1626 = vmatpush1.bf16.msra.mxu0 %v1541
    %1627 = vmatprep.subr.bf16.mxu0 0
    %1628 = vmatpush1.bf16.msra.mxu0 %v1542
    %1629 = vmatprep.subr.bf16.mxu0 0
    %1630 = vmatpush1.bf16.msra.mxu0 %v1543
    %1631 = vmatprep.subr.bf16.mxu0 0
    %1632 = vmatpush1.bf16.msra.mxu0 %v1544
    %1633 = vmatprep.subr.bf16.mxu0 0
    %1634 = vmatpush1.bf16.msra.mxu0 %v1545
    %1635 = vmatprep.subr.bf16.mxu0 0
    %1636 = vmatpush1.bf16.msra.mxu0 %v1546
    %1637 = vmatprep.subr.bf16.mxu0 0
    %1638 = vmatpush1.bf16.msra.mxu0 %v1547
    %1639 = vmatprep.subr.bf16.mxu0 0
    %1640 = vmatpush1.bf16.msra.mxu0 %v1548
    %1641 = vmatprep.subr.bf16.mxu0 0
    %1642 = vmatpush1.bf16.msra.mxu0 %v1549
    %1643 = vmatprep.subr.bf16.mxu0 0
    %1644 = vmatpush1.bf16.msra.mxu0 %v1550
    %1645 = vmatprep.subr.bf16.mxu0 0
    %1646 = vmatpush1.bf16.msra.mxu0 %v1551
    %1647 = vmatprep.subr.bf16.mxu0 0
    %1648 = vmatpush1.bf16.msra.mxu0 %v1552
    %1649 = vmatprep.mubr.bf16.mxu0 %v1286
    %1650 = vmatmul.mubr.bf16.gmra.mrb[0].mxu0 %v1285
    %v1651 = vpop.f32.mrb[0].mxu0
    %v1652 = vadd.f32 %v1375, %v1651
    %v1653 = vpop.f32.mrb[0].mxu0
    %v1654 = vpop.f32.mrb[0].mxu0
    %v1655 = vpop.f32.mrb[0].mxu0
    %1656 = vdwg.mxu0
    %1657 = vmatprep.subr.bf16.mxu0 0
    %1658 = vmatpush1.bf16.msra.mxu0 %v1553
    %1659 = vmatprep.subr.bf16.mxu0 0
    %1660 = vmatpush1.bf16.msra.mxu0 %v1554
    %1661 = vmatprep.subr.bf16.mxu0 0
    %1662 = vmatpush1.bf16.msra.mxu0 %v1555
    %1663 = vmatprep.subr.bf16.mxu0 0
    %1664 = vmatpush1.bf16.msra.mxu0 %v1556
    %1665 = vmatprep.subr.bf16.mxu0 0
    %1666 = vmatpush1.bf16.msra.mxu0 %v1557
    %1667 = vmatprep.subr.bf16.mxu0 0
    %1668 = vmatpush1.bf16.msra.mxu0 %v1558
    %1669 = vmatprep.subr.bf16.mxu0 0
    %1670 = vmatpush1.bf16.msra.mxu0 %v1559
    %1671 = vmatprep.subr.bf16.mxu0 0
    %1672 = vmatpush1.bf16.msra.mxu0 %v1560
    %1673 = vmatprep.subr.bf16.mxu0 0
    %1674 = vmatpush1.bf16.msra.mxu0 %v1561
    %1675 = vmatprep.subr.bf16.mxu0 0
    %1676 = vmatpush1.bf16.msra.mxu0 %v1562
    %1677 = vmatprep.subr.bf16.mxu0 0
    %1678 = vmatpush1.bf16.msra.mxu0 %v1563
    %1679 = vmatprep.subr.bf16.mxu0 0
    %1680 = vmatpush1.bf16.msra.mxu0 %v1564
    %1681 = vmatprep.subr.bf16.mxu0 0
    %1682 = vmatpush1.bf16.msra.mxu0 %v1565
    %1683 = vmatprep.subr.bf16.mxu0 0
    %1684 = vmatpush1.bf16.msra.mxu0 %v1566
    %1685 = vmatprep.subr.bf16.mxu0 0
    %1686 = vmatpush1.bf16.msra.mxu0 %v1567
    %1687 = vmatprep.subr.bf16.mxu0 0
    %1688 = vmatpush1.bf16.msra.mxu0 %v1568
    %1689 = vmatprep.mubr.bf16.mxu0 %v1288
    %1690 = vmatmul.mubr.bf16.gmra.mrb[0].mxu0 %v1287
    %v1691 = vpop.f32.mrb[0].mxu0
    %v1692 = vadd.f32 %v1652, %v1691
    %v1693 = vpop.f32.mrb[0].mxu0
    %v1694 = vpop.f32.mrb[0].mxu0
    %v1695 = vpop.f32.mrb[0].mxu0
    %1696 = vdwg.mxu0
    %1697 = vmatprep.subr.bf16.mxu0 0
    %1698 = vmatpush1.bf16.msra.mxu0 %v1569
    %1699 = vmatprep.subr.bf16.mxu0 0
    %1700 = vmatpush1.bf16.msra.mxu0 %v1570
    %1701 = vmatprep.subr.bf16.mxu0 0
    %1702 = vmatpush1.bf16.msra.mxu0 %v1571
    %1703 = vmatprep.subr.bf16.mxu0 0
    %1704 = vmatpush1.bf16.msra.mxu0 %v1572
    %1705 = vmatprep.subr.bf16.mxu0 0
    %1706 = vmatpush1.bf16.msra.mxu0 %v1573
    %1707 = vmatprep.subr.bf16.mxu0 0
    %1708 = vmatpush1.bf16.msra.mxu0 %v1574
    %1709 = vmatprep.subr.bf16.mxu0 0
    %1710 = vmatpush1.bf16.msra.mxu0 %v1575
    %1711 = vmatprep.subr.bf16.mxu0 0
    %1712 = vmatpush1.bf16.msra.mxu0 %v1576
    %1713 = vmatprep.subr.bf16.mxu0 0
    %1714 = vmatpush1.bf16.msra.mxu0 0
    %1715 = vmatprep.subr.bf16.mxu0 0
    %1716 = vmatpush1.bf16.msra.mxu0 0
    %1717 = vmatprep.subr.bf16.mxu0 0
    %1718 = vmatpush1.bf16.msra.mxu0 0
    %1719 = vmatprep.subr.bf16.mxu0 0
    %1720 = vmatpush1.bf16.msra.mxu0 0
    %1721 = vmatprep.subr.bf16.mxu0 0
    %1722 = vmatpush1.bf16.msra.mxu0 0
    %1723 = vmatprep.subr.bf16.mxu0 0
    %1724 = vmatpush1.bf16.msra.mxu0 0
    %1725 = vmatprep.subr.bf16.mxu0 0
    %1726 = vmatpush1.bf16.msra.mxu0 0
    %1727 = vmatprep.subr.bf16.mxu0 0
    %1728 = vmatpush1.bf16.msra.mxu0 0
    %1729 = vmatprep.mubr.bf16.mxu0 0
    %1730 = vmatmul.mubr.bf16.gmra.mrb[0].mxu0 %v1289
    %v1731 = vpop.f32.mrb[0].mxu0
    %v1732 = vadd.f32 %v1692, %v1731
    %v1733 = vpop.f32.mrb[0].mxu0
    %v1734 = vpop.f32.mrb[0].mxu0
    %v1735 = vpop.f32.mrb[0].mxu0
    %1736 = vdwg.mxu0
    %1737 = vst [vmem:[#allocation10] sm:$0xff] %v1732
    // Predicated region
    $region46: #{tpu_custom_call.1} parent=1 // pred_check
      _
    $region47: #{tpu_custom_call.1} parent=1 // pred_check_branch
      %1739 = sbr.rel (0) target = $region49
    $region48: #{tpu_custom_call.1} parent=1 // pred_region
      %s1741 = ssub.s32 128, 128
      %1742 = vsyncadd [#allocation4], %s1741
      %s1744 = sshll.u32 [#allocation10], 4
      %s1745 = int_to_ptr.vmem [resolvable:$true] %s1744
      %1747 = dma.vmem_to_hbm [thread:$0]  %s1745, 128, %s7, [#allocation4]
    $region49: #{tpu_custom_call.1} parent=1 // pred_fallthru
      _
    // Predicated region
    $region50: #{tpu_custom_call.1} parent=1 // pred_check
      _
    $region51: #{tpu_custom_call.1} parent=1 // pred_check_branch
      %1749 = sbr.rel (0) target = $region53
    $region52: #{tpu_custom_call.1} parent=1 // pred_region
      %1750 = dma.done [#allocation4], 128
    $region53: #{tpu_custom_call.1} parent=1 // pred_fallthru
      _
    %1751 = vsyncpa [#allocation3], 1
    %1752 = vsyncpa [#allocation6], 1
    %1753 = vsyncpa [#allocation9], 1
    %1754 = vsyncpa [#allocation4], 1

</llo_original>
